<compile_context>
chip_gen: v7x
topology: tpu7x:2x2x1
jax: 0.10.0
libtpu: 0.0.40
codegen_flags: <defaults>
</compile_context>

<pallas_src>
import jax
import jax.numpy as jnp
from jax.experimental import pallas as pl
from jax.experimental.pallas import tpu as pltpu


def _round_up(x, m):
    return (x + m - 1) // m * m


def gru_kernel(emb_ref, w_ih_t_ref, w_hh_t_ref, b_gi_ref, b_hhn_ref,
               w_out_t_ref, b_out_ref, out_ref, gi_scratch):
    TB = emb_ref.shape[0]
    Hp = w_hh_t_ref.shape[0]
    Bp = out_ref.shape[0]
    T = TB // Bp

    # Hoisted input projection for ALL timesteps (off the serial critical
    # path): one (T*Bp, Ep) @ (Ep, 3*Hp) MXU pass + bias, stored to VMEM.
    gi_scratch[...] = (
        jnp.dot(emb_ref[...], w_ih_t_ref[...],
                preferred_element_type=jnp.float32)
        + b_gi_ref[...]
    )

    # Hoist loop-invariant loads / broadcasts out of the recurrence.
    w_hh_t = w_hh_t_ref[...]                                    # (Hp, 3*Hp)
    b_hh_n = jnp.broadcast_to(b_hhn_ref[...], (Bp, Hp))         # (Bp, Hp)

    def step(t, h):
        start = pl.multiple_of(t * Bp, Bp)
        gi = gi_scratch[pl.ds(start, Bp), :]                    # (Bp, 3*Hp)
        gh = jnp.dot(h, w_hh_t, preferred_element_type=jnp.float32)
        # Gate blocks are lane-aligned: each gate owns a full Hp=128 block.
        r = jax.nn.sigmoid(gi[:, 0 * Hp:1 * Hp] + gh[:, 0 * Hp:1 * Hp])
        z = jax.nn.sigmoid(gi[:, 1 * Hp:2 * Hp] + gh[:, 1 * Hp:2 * Hp])
        n = jnp.tanh(gi[:, 2 * Hp:3 * Hp] + r * (gh[:, 2 * Hp:3 * Hp] + b_hh_n))
        return (1.0 - z) * n + z * h

    h = jax.lax.fori_loop(0, T, step, jnp.zeros((Bp, Hp), jnp.float32),
                          unroll=True)

    # Output Linear + log_softmax (padded logit lanes carry a -1e30 bias).
    logits = jnp.dot(h, w_out_t_ref[...],
                     preferred_element_type=jnp.float32) + b_out_ref[...]
    m = jnp.max(logits, axis=-1, keepdims=True)
    shifted = logits - m
    lse = jnp.log(jnp.sum(jnp.exp(shifted), axis=-1, keepdims=True))
    out_ref[...] = shifted - lse


def simple_gru_forward(seq, params):
    """seq: (T, B) int32 token ids. Returns (B, n_out) float32 log-probs."""
    emb_w = params["emb"]            # (V, E)
    w_ih = params["w_ih"]            # (3H, E)
    w_hh = params["w_hh"]            # (3H, H)
    b_ih = params["b_ih"]            # (3H,)
    b_hh = params["b_hh"]            # (3H,)
    w_out = params["w_out"]          # (n_out, H)
    b_out = params["b_out"]          # (n_out,)

    T, B = seq.shape
    E = emb_w.shape[1]
    H = w_hh.shape[1]
    n_out = w_out.shape[0]

    Bp = _round_up(B, 8)             # f32 sublane tile
    Ep = _round_up(E, 128)           # lane tile (contraction dim)
    Hp = _round_up(H, 128)           # each gate gets a full lane-aligned block
    Np = _round_up(n_out, 128)       # lane-dense output store

    # Embedding gather (wrapper glue), zero-padded, flattened to (T*Bp, Ep).
    # TODO(synk): at production E/T, move this gather into the kernel via
    # scalar-prefetched token ids + a row-gather BlockSpec to avoid the HBM
    # round trip of the (T, B, E) activations.
    embs = jnp.take(emb_w, seq, axis=0)                         # (T, B, E)
    embs_p = jnp.zeros((T, Bp, Ep), jnp.float32).at[:, :B, :E].set(embs)
    embs_p = embs_p.reshape(T * Bp, Ep)

    # Gate-blocked, transposed, lane-padded weights:
    # gate g in (r, z, n) occupies columns [g*Hp, g*Hp + H).
    def gate_pack_w(w, rows_p):                                 # w: (3H, D)
        D = w.shape[1]
        out = jnp.zeros((rows_p, 3 * Hp), jnp.float32)
        for g in range(3):
            out = out.at[:D, g * Hp:g * Hp + H].set(w[g * H:(g + 1) * H, :].T)
        return out

    def gate_pack_b(b):                                         # b: (3H,)
        out = jnp.zeros((1, 3 * Hp), jnp.float32)
        for g in range(3):
            out = out.at[0, g * Hp:g * Hp + H].set(b[g * H:(g + 1) * H])
        return out

    w_ih_t_p = gate_pack_w(w_ih, Ep)                            # (Ep, 3*Hp)
    w_hh_t_p = gate_pack_w(w_hh, Hp)                            # (Hp, 3*Hp)

    # Fold b_hh's r/z parts into the hoisted input-projection bias; b_hh_n
    # stays separate because it is multiplied by r inside the tanh.
    b_gi_p = gate_pack_b(
        jnp.concatenate([b_ih[:2 * H] + b_hh[:2 * H], b_ih[2 * H:]]))
    b_hh_n_p = jnp.zeros((1, Hp), jnp.float32).at[0, :H].set(b_hh[2 * H:])

    w_out_t_p = jnp.zeros((Hp, Np), jnp.float32).at[:H, :n_out].set(w_out.T)
    # Padded logit lanes get a huge negative bias so log_softmax ignores them.
    b_out_p = jnp.full((1, Np), -1e30, jnp.float32).at[0, :n_out].set(b_out)

    out_p = pl.pallas_call(
        gru_kernel,
        out_shape=jax.ShapeDtypeStruct((Bp, Np), jnp.float32),
        grid_spec=pltpu.PrefetchScalarGridSpec(
            num_scalar_prefetch=0,
            grid=(1,),                                          # single step
            in_specs=[
                pl.BlockSpec((T * Bp, Ep), lambda i: (0, 0)),   # embeddings
                pl.BlockSpec((Ep, 3 * Hp), lambda i: (0, 0)),   # W_ih^T
                pl.BlockSpec((Hp, 3 * Hp), lambda i: (0, 0)),   # W_hh^T
                pl.BlockSpec((1, 3 * Hp), lambda i: (0, 0)),    # folded b_gi
                pl.BlockSpec((1, Hp), lambda i: (0, 0)),        # b_hh_n
                pl.BlockSpec((Hp, Np), lambda i: (0, 0)),       # W_out^T
                pl.BlockSpec((1, Np), lambda i: (0, 0)),        # b_out
            ],
            out_specs=pl.BlockSpec((Bp, Np), lambda i: (0, 0)),
            scratch_shapes=[pltpu.VMEM((T * Bp, 3 * Hp), jnp.float32)],
        ),
        compiler_params=pltpu.CompilerParams(
            dimension_semantics=("arbitrary",),
        ),
    )(embs_p, w_ih_t_p, w_hh_t_p, b_gi_p, b_hh_n_p, w_out_t_p, b_out_p)

    return out_p[:B, :n_out]


def init_params(key, vocab_size, embedding_dim, n_hidden, n_out):
    ks = jax.random.split(key, 7)
    s = 0.1
    return {
        "emb": s * jax.random.normal(ks[0], (vocab_size, embedding_dim), jnp.float32),
        "w_ih": s * jax.random.normal(ks[1], (3 * n_hidden, embedding_dim), jnp.float32),
        "w_hh": s * jax.random.normal(ks[2], (3 * n_hidden, n_hidden), jnp.float32),
        "b_ih": s * jax.random.normal(ks[3], (3 * n_hidden,), jnp.float32),
        "b_hh": s * jax.random.normal(ks[4], (3 * n_hidden,), jnp.float32),
        "w_out": s * jax.random.normal(ks[5], (n_out, n_hidden), jnp.float32),
        "b_out": s * jax.random.normal(ks[6], (n_out,), jnp.float32),
    }


def reference_forward(seq, params):
    """Pure-JAX reference reproducing PyTorch SimpleGRU.forward semantics."""
    emb_w, w_ih, w_hh = params["emb"], params["w_ih"], params["w_hh"]
    b_ih, b_hh = params["b_ih"], params["b_hh"]
    w_out, b_out = params["w_out"], params["b_out"]
    H = w_hh.shape[1]
    embs = jnp.take(emb_w, seq, axis=0)
    B = seq.shape[1]
    h = jnp.zeros((B, H), jnp.float32)

    def step(h, x):
        gi = x @ w_ih.T + b_ih
        gh = h @ w_hh.T + b_hh
        i_r, i_z, i_n = gi[:, :H], gi[:, H:2 * H], gi[:, 2 * H:]
        h_r, h_z, h_n = gh[:, :H], gh[:, H:2 * H], gh[:, 2 * H:]
        r = jax.nn.sigmoid(i_r + h_r)
        z = jax.nn.sigmoid(i_z + h_z)
        n = jnp.tanh(i_n + r * h_n)
        h_new = (1.0 - z) * n + z * h
        return h_new, None

    h, _ = jax.lax.scan(step, h, embs)
    logits = h @ w_out.T + b_out
    return jax.nn.log_softmax(logits, axis=-1)


if __name__ == "__main__":
    vocab_size, embedding_dim, n_hidden, n_out = 50, 16, 32, 8
    seq_len, batch = 8, 4

    key = jax.random.PRNGKey(0)
    pkey, skey = jax.random.split(key)
    params = init_params(pkey, vocab_size, embedding_dim, n_hidden, n_out)
    seq = jax.random.randint(skey, (seq_len, batch), 0, vocab_size, dtype=jnp.int32)

    out = simple_gru_forward(seq, params)
    out = jax.block_until_ready(out)

    ref = reference_forward(seq, params)
    assert out.shape == (batch, n_out)
    assert jnp.allclose(out, ref, atol=1e-5, rtol=1e-5)

    print("KERNEL_OK")
</pallas_src>

<mosaic_0001>
module attributes {stable_mosaic.version = 11 : i64} {
  func.func @gru_kernel(%arg0: i32, %arg1: memref<64x128xf32, #tpu.memory_space<vmem>>, %arg2: memref<128x384xf32, #tpu.memory_space<vmem>>, %arg3: memref<128x384xf32, #tpu.memory_space<vmem>>, %arg4: memref<1x384xf32, #tpu.memory_space<vmem>>, %arg5: memref<1x128xf32, #tpu.memory_space<vmem>>, %arg6: memref<128x128xf32, #tpu.memory_space<vmem>>, %arg7: memref<1x128xf32, #tpu.memory_space<vmem>>, %arg8: memref<8x128xf32, #tpu.memory_space<vmem>>, %arg9: memref<64x384xf32, #tpu.memory_space<vmem>>) attributes {dimension_semantics = [#tpu.dimension_semantics<arbitrary>], iteration_bounds = array<i64: 1>, scalar_prefetch = 0 : i64, scratch_operands = 1 : i64, tpu.core_type = #tpu.core_type<tc>, window_params = [{pipeline_mode = #tpu.pipeline_mode<synchronous>, transform_indices = @transform_0, window_bounds = array<i64: 64, 128>}, {pipeline_mode = #tpu.pipeline_mode<synchronous>, transform_indices = @transform_1, window_bounds = array<i64: 128, 384>}, {pipeline_mode = #tpu.pipeline_mode<synchronous>, transform_indices = @transform_2, window_bounds = array<i64: 128, 384>}, {pipeline_mode = #tpu.pipeline_mode<synchronous>, transform_indices = @transform_3, window_bounds = array<i64: 1, 384>}, {pipeline_mode = #tpu.pipeline_mode<synchronous>, transform_indices = @transform_4, window_bounds = array<i64: 1, 128>}, {pipeline_mode = #tpu.pipeline_mode<synchronous>, transform_indices = @transform_5, window_bounds = array<i64: 128, 128>}, {pipeline_mode = #tpu.pipeline_mode<synchronous>, transform_indices = @transform_6, window_bounds = array<i64: 1, 128>}, {pipeline_mode = #tpu.pipeline_mode<synchronous>, transform_indices = @transform_7, window_bounds = array<i64: 8, 128>}]} {
    %c0 = arith.constant 0 : index
    %c0_0 = arith.constant 0 : index
    %0 = vector.load %arg1[%c0, %c0_0] : memref<64x128xf32, #tpu.memory_space<vmem>>, vector<64x128xf32>
    %c0_1 = arith.constant 0 : index
    %c0_2 = arith.constant 0 : index
    %1 = vector.load %arg2[%c0_1, %c0_2] : memref<128x384xf32, #tpu.memory_space<vmem>>, vector<128x384xf32>
    %cst = arith.constant dense<0.000000e+00> : vector<64x384xf32>
    %2 = tpu.matmul %0, %1, %cst {dimension_numbers = #tpu.dot_dimension_numbers<[1], [0], [0], [1], [0, 0, 1, 1], [], []>} : vector<64x128xf32>, vector<128x384xf32>, vector<64x384xf32> -> vector<64x384xf32>
    %c0_3 = arith.constant 0 : index
    %c0_4 = arith.constant 0 : index
    %3 = vector.load %arg4[%c0_3, %c0_4] : memref<1x384xf32, #tpu.memory_space<vmem>>, vector<1x384xf32>
    %4 = vector.broadcast %3 : vector<1x384xf32> to vector<64x384xf32>
    %5 = arith.addf %2, %4 : vector<64x384xf32>
    %c0_5 = arith.constant 0 : index
    %c0_6 = arith.constant 0 : index
    %6 = vector.load %arg9[%c0_5, %c0_6] : memref<64x384xf32, #tpu.memory_space<vmem>>, vector<64x384xf32>
    tpu.vector_store %arg9[%c0_5, %c0_6], %5 {strides = array<i32>} : memref<64x384xf32, #tpu.memory_space<vmem>>, vector<64x384xf32>,
    %c0_7 = arith.constant 0 : index
    %c0_8 = arith.constant 0 : index
    %7 = vector.load %arg3[%c0_7, %c0_8] : memref<128x384xf32, #tpu.memory_space<vmem>>, vector<128x384xf32>
    %c0_9 = arith.constant 0 : index
    %c0_10 = arith.constant 0 : index
    %8 = vector.load %arg5[%c0_9, %c0_10] : memref<1x128xf32, #tpu.memory_space<vmem>>, vector<1x128xf32>
    %9 = vector.shape_cast %8 : vector<1x128xf32> to vector<1x128xf32>
    %10 = vector.broadcast %9 : vector<1x128xf32> to vector<8x128xf32>
    %cst_11 = arith.constant 0.000000e+00 : f32
    %11 = vector.broadcast %cst_11 : f32 to vector<8x128xf32>
    %c0_i32 = arith.constant 0 : i32
    %c8_i32 = arith.constant 8 : i32
    %12 = arith.muli %c0_i32, %c8_i32 : i32
    %13 = tpu.assume_multiple %12, 8 : i32
    %14 = arith.index_cast %13 : i32 to index
    %c0_12 = arith.constant 0 : index
    %15 = vector.load %arg9[%14, %c0_12] : memref<64x384xf32, #tpu.memory_space<vmem>>, vector<8x384xf32>
    %cst_13 = arith.constant dense<0.000000e+00> : vector<8x384xf32>
    %16 = tpu.matmul %11, %7, %cst_13 {dimension_numbers = #tpu.dot_dimension_numbers<[1], [0], [0], [1], [0, 0, 1, 1], [], []>} : vector<8x128xf32>, vector<128x384xf32>, vector<8x384xf32> -> vector<8x384xf32>
    %17 = vector.extract_strided_slice %15 {offsets = [0, 0], sizes = [8, 128], strides = [1, 1]} : vector<8x384xf32> to vector<8x128xf32>
    %18 = vector.extract_strided_slice %16 {offsets = [0, 0], sizes = [8, 128], strides = [1, 1]} : vector<8x384xf32> to vector<8x128xf32>
    %19 = arith.addf %17, %18 : vector<8x128xf32>
    %20 = arith.negf %19 : vector<8x128xf32>
    %21 = math.exp %20 : vector<8x128xf32>
    %cst_14 = arith.constant 1.000000e+00 : f32
    %22 = vector.broadcast %cst_14 : f32 to vector<8x128xf32>
    %23 = arith.addf %22, %21 : vector<8x128xf32>
    %24 = arith.divf %22, %23 : vector<8x128xf32>
    %25 = vector.extract_strided_slice %15 {offsets = [0, 128], sizes = [8, 128], strides = [1, 1]} : vector<8x384xf32> to vector<8x128xf32>
    %26 = vector.extract_strided_slice %16 {offsets = [0, 128], sizes = [8, 128], strides = [1, 1]} : vector<8x384xf32> to vector<8x128xf32>
    %27 = arith.addf %25, %26 : vector<8x128xf32>
    %28 = arith.negf %27 : vector<8x128xf32>
    %29 = math.exp %28 : vector<8x128xf32>
    %cst_15 = arith.constant 1.000000e+00 : f32
    %30 = vector.broadcast %cst_15 : f32 to vector<8x128xf32>
    %31 = arith.addf %30, %29 : vector<8x128xf32>
    %32 = arith.divf %30, %31 : vector<8x128xf32>
    %33 = vector.extract_strided_slice %15 {offsets = [0, 256], sizes = [8, 128], strides = [1, 1]} : vector<8x384xf32> to vector<8x128xf32>
    %34 = vector.extract_strided_slice %16 {offsets = [0, 256], sizes = [8, 128], strides = [1, 1]} : vector<8x384xf32> to vector<8x128xf32>
    %35 = arith.addf %34, %10 : vector<8x128xf32>
    %36 = arith.mulf %24, %35 : vector<8x128xf32>
    %37 = arith.addf %33, %36 : vector<8x128xf32>
    %38 = math.tanh %37 : vector<8x128xf32>
    %cst_16 = arith.constant 1.000000e+00 : f32
    %39 = vector.broadcast %cst_16 : f32 to vector<8x128xf32>
    %40 = arith.subf %39, %32 : vector<8x128xf32>
    %41 = arith.mulf %40, %38 : vector<8x128xf32>
    %42 = arith.mulf %32, %11 : vector<8x128xf32>
    %43 = arith.addf %41, %42 : vector<8x128xf32>
    %c1_i32 = arith.constant 1 : i32
    %c8_i32_17 = arith.constant 8 : i32
    %44 = arith.muli %c1_i32, %c8_i32_17 : i32
    %45 = tpu.assume_multiple %44, 8 : i32
    %46 = arith.index_cast %45 : i32 to index
    %c0_18 = arith.constant 0 : index
    %47 = vector.load %arg9[%46, %c0_18] : memref<64x384xf32, #tpu.memory_space<vmem>>, vector<8x384xf32>
    %cst_19 = arith.constant dense<0.000000e+00> : vector<8x384xf32>
    %48 = tpu.matmul %43, %7, %cst_19 {dimension_numbers = #tpu.dot_dimension_numbers<[1], [0], [0], [1], [0, 0, 1, 1], [], []>} : vector<8x128xf32>, vector<128x384xf32>, vector<8x384xf32> -> vector<8x384xf32>
    %49 = vector.extract_strided_slice %47 {offsets = [0, 0], sizes = [8, 128], strides = [1, 1]} : vector<8x384xf32> to vector<8x128xf32>
    %50 = vector.extract_strided_slice %48 {offsets = [0, 0], sizes = [8, 128], strides = [1, 1]} : vector<8x384xf32> to vector<8x128xf32>
    %51 = arith.addf %49, %50 : vector<8x128xf32>
    %52 = arith.negf %51 : vector<8x128xf32>
    %53 = math.exp %52 : vector<8x128xf32>
    %cst_20 = arith.constant 1.000000e+00 : f32
    %54 = vector.broadcast %cst_20 : f32 to vector<8x128xf32>
    %55 = arith.addf %54, %53 : vector<8x128xf32>
    %56 = arith.divf %54, %55 : vector<8x128xf32>
    %57 = vector.extract_strided_slice %47 {offsets = [0, 128], sizes = [8, 128], strides = [1, 1]} : vector<8x384xf32> to vector<8x128xf32>
    %58 = vector.extract_strided_slice %48 {offsets = [0, 128], sizes = [8, 128], strides = [1, 1]} : vector<8x384xf32> to vector<8x128xf32>
    %59 = arith.addf %57, %58 : vector<8x128xf32>
    %60 = arith.negf %59 : vector<8x128xf32>
    %61 = math.exp %60 : vector<8x128xf32>
    %cst_21 = arith.constant 1.000000e+00 : f32
    %62 = vector.broadcast %cst_21 : f32 to vector<8x128xf32>
    %63 = arith.addf %62, %61 : vector<8x128xf32>
    %64 = arith.divf %62, %63 : vector<8x128xf32>
    %65 = vector.extract_strided_slice %47 {offsets = [0, 256], sizes = [8, 128], strides = [1, 1]} : vector<8x384xf32> to vector<8x128xf32>
    %66 = vector.extract_strided_slice %48 {offsets = [0, 256], sizes = [8, 128], strides = [1, 1]} : vector<8x384xf32> to vector<8x128xf32>
    %67 = arith.addf %66, %10 : vector<8x128xf32>
    %68 = arith.mulf %56, %67 : vector<8x128xf32>
    %69 = arith.addf %65, %68 : vector<8x128xf32>
    %70 = math.tanh %69 : vector<8x128xf32>
    %cst_22 = arith.constant 1.000000e+00 : f32
    %71 = vector.broadcast %cst_22 : f32 to vector<8x128xf32>
    %72 = arith.subf %71, %64 : vector<8x128xf32>
    %73 = arith.mulf %72, %70 : vector<8x128xf32>
    %74 = arith.mulf %64, %43 : vector<8x128xf32>
    %75 = arith.addf %73, %74 : vector<8x128xf32>
    %c2_i32 = arith.constant 2 : i32
    %c8_i32_23 = arith.constant 8 : i32
    %76 = arith.muli %c2_i32, %c8_i32_23 : i32
    %77 = tpu.assume_multiple %76, 8 : i32
    %78 = arith.index_cast %77 : i32 to index
    %c0_24 = arith.constant 0 : index
    %79 = vector.load %arg9[%78, %c0_24] : memref<64x384xf32, #tpu.memory_space<vmem>>, vector<8x384xf32>
    %cst_25 = arith.constant dense<0.000000e+00> : vector<8x384xf32>
    %80 = tpu.matmul %75, %7, %cst_25 {dimension_numbers = #tpu.dot_dimension_numbers<[1], [0], [0], [1], [0, 0, 1, 1], [], []>} : vector<8x128xf32>, vector<128x384xf32>, vector<8x384xf32> -> vector<8x384xf32>
    %81 = vector.extract_strided_slice %79 {offsets = [0, 0], sizes = [8, 128], strides = [1, 1]} : vector<8x384xf32> to vector<8x128xf32>
    %82 = vector.extract_strided_slice %80 {offsets = [0, 0], sizes = [8, 128], strides = [1, 1]} : vector<8x384xf32> to vector<8x128xf32>
    %83 = arith.addf %81, %82 : vector<8x128xf32>
    %84 = arith.negf %83 : vector<8x128xf32>
    %85 = math.exp %84 : vector<8x128xf32>
    %cst_26 = arith.constant 1.000000e+00 : f32
    %86 = vector.broadcast %cst_26 : f32 to vector<8x128xf32>
    %87 = arith.addf %86, %85 : vector<8x128xf32>
    %88 = arith.divf %86, %87 : vector<8x128xf32>
    %89 = vector.extract_strided_slice %79 {offsets = [0, 128], sizes = [8, 128], strides = [1, 1]} : vector<8x384xf32> to vector<8x128xf32>
    %90 = vector.extract_strided_slice %80 {offsets = [0, 128], sizes = [8, 128], strides = [1, 1]} : vector<8x384xf32> to vector<8x128xf32>
    %91 = arith.addf %89, %90 : vector<8x128xf32>
    %92 = arith.negf %91 : vector<8x128xf32>
    %93 = math.exp %92 : vector<8x128xf32>
    %cst_27 = arith.constant 1.000000e+00 : f32
    %94 = vector.broadcast %cst_27 : f32 to vector<8x128xf32>
    %95 = arith.addf %94, %93 : vector<8x128xf32>
    %96 = arith.divf %94, %95 : vector<8x128xf32>
    %97 = vector.extract_strided_slice %79 {offsets = [0, 256], sizes = [8, 128], strides = [1, 1]} : vector<8x384xf32> to vector<8x128xf32>
    %98 = vector.extract_strided_slice %80 {offsets = [0, 256], sizes = [8, 128], strides = [1, 1]} : vector<8x384xf32> to vector<8x128xf32>
    %99 = arith.addf %98, %10 : vector<8x128xf32>
    %100 = arith.mulf %88, %99 : vector<8x128xf32>
    %101 = arith.addf %97, %100 : vector<8x128xf32>
    %102 = math.tanh %101 : vector<8x128xf32>
    %cst_28 = arith.constant 1.000000e+00 : f32
    %103 = vector.broadcast %cst_28 : f32 to vector<8x128xf32>
    %104 = arith.subf %103, %96 : vector<8x128xf32>
    %105 = arith.mulf %104, %102 : vector<8x128xf32>
    %106 = arith.mulf %96, %75 : vector<8x128xf32>
    %107 = arith.addf %105, %106 : vector<8x128xf32>
    %c3_i32 = arith.constant 3 : i32
    %c8_i32_29 = arith.constant 8 : i32
    %108 = arith.muli %c3_i32, %c8_i32_29 : i32
    %109 = tpu.assume_multiple %108, 8 : i32
    %110 = arith.index_cast %109 : i32 to index
    %c0_30 = arith.constant 0 : index
    %111 = vector.load %arg9[%110, %c0_30] : memref<64x384xf32, #tpu.memory_space<vmem>>, vector<8x384xf32>
    %cst_31 = arith.constant dense<0.000000e+00> : vector<8x384xf32>
    %112 = tpu.matmul %107, %7, %cst_31 {dimension_numbers = #tpu.dot_dimension_numbers<[1], [0], [0], [1], [0, 0, 1, 1], [], []>} : vector<8x128xf32>, vector<128x384xf32>, vector<8x384xf32> -> vector<8x384xf32>
    %113 = vector.extract_strided_slice %111 {offsets = [0, 0], sizes = [8, 128], strides = [1, 1]} : vector<8x384xf32> to vector<8x128xf32>
    %114 = vector.extract_strided_slice %112 {offsets = [0, 0], sizes = [8, 128], strides = [1, 1]} : vector<8x384xf32> to vector<8x128xf32>
    %115 = arith.addf %113, %114 : vector<8x128xf32>
    %116 = arith.negf %115 : vector<8x128xf32>
    %117 = math.exp %116 : vector<8x128xf32>
    %cst_32 = arith.constant 1.000000e+00 : f32
    %118 = vector.broadcast %cst_32 : f32 to vector<8x128xf32>
    %119 = arith.addf %118, %117 : vector<8x128xf32>
    %120 = arith.divf %118, %119 : vector<8x128xf32>
    %121 = vector.extract_strided_slice %111 {offsets = [0, 128], sizes = [8, 128], strides = [1, 1]} : vector<8x384xf32> to vector<8x128xf32>
    %122 = vector.extract_strided_slice %112 {offsets = [0, 128], sizes = [8, 128], strides = [1, 1]} : vector<8x384xf32> to vector<8x128xf32>
    %123 = arith.addf %121, %122 : vector<8x128xf32>
    %124 = arith.negf %123 : vector<8x128xf32>
    %125 = math.exp %124 : vector<8x128xf32>
    %cst_33 = arith.constant 1.000000e+00 : f32
    %126 = vector.broadcast %cst_33 : f32 to vector<8x128xf32>
    %127 = arith.addf %126, %125 : vector<8x128xf32>
    %128 = arith.divf %126, %127 : vector<8x128xf32>
    %129 = vector.extract_strided_slice %111 {offsets = [0, 256], sizes = [8, 128], strides = [1, 1]} : vector<8x384xf32> to vector<8x128xf32>
    %130 = vector.extract_strided_slice %112 {offsets = [0, 256], sizes = [8, 128], strides = [1, 1]} : vector<8x384xf32> to vector<8x128xf32>
    %131 = arith.addf %130, %10 : vector<8x128xf32>
    %132 = arith.mulf %120, %131 : vector<8x128xf32>
    %133 = arith.addf %129, %132 : vector<8x128xf32>
    %134 = math.tanh %133 : vector<8x128xf32>
    %cst_34 = arith.constant 1.000000e+00 : f32
    %135 = vector.broadcast %cst_34 : f32 to vector<8x128xf32>
    %136 = arith.subf %135, %128 : vector<8x128xf32>
    %137 = arith.mulf %136, %134 : vector<8x128xf32>
    %138 = arith.mulf %128, %107 : vector<8x128xf32>
    %139 = arith.addf %137, %138 : vector<8x128xf32>
    %c4_i32 = arith.constant 4 : i32
    %c8_i32_35 = arith.constant 8 : i32
    %140 = arith.muli %c4_i32, %c8_i32_35 : i32
    %141 = tpu.assume_multiple %140, 8 : i32
    %142 = arith.index_cast %141 : i32 to index
    %c0_36 = arith.constant 0 : index
    %143 = vector.load %arg9[%142, %c0_36] : memref<64x384xf32, #tpu.memory_space<vmem>>, vector<8x384xf32>
    %cst_37 = arith.constant dense<0.000000e+00> : vector<8x384xf32>
    %144 = tpu.matmul %139, %7, %cst_37 {dimension_numbers = #tpu.dot_dimension_numbers<[1], [0], [0], [1], [0, 0, 1, 1], [], []>} : vector<8x128xf32>, vector<128x384xf32>, vector<8x384xf32> -> vector<8x384xf32>
    %145 = vector.extract_strided_slice %143 {offsets = [0, 0], sizes = [8, 128], strides = [1, 1]} : vector<8x384xf32> to vector<8x128xf32>
    %146 = vector.extract_strided_slice %144 {offsets = [0, 0], sizes = [8, 128], strides = [1, 1]} : vector<8x384xf32> to vector<8x128xf32>
    %147 = arith.addf %145, %146 : vector<8x128xf32>
    %148 = arith.negf %147 : vector<8x128xf32>
    %149 = math.exp %148 : vector<8x128xf32>
    %cst_38 = arith.constant 1.000000e+00 : f32
    %150 = vector.broadcast %cst_38 : f32 to vector<8x128xf32>
    %151 = arith.addf %150, %149 : vector<8x128xf32>
    %152 = arith.divf %150, %151 : vector<8x128xf32>
    %153 = vector.extract_strided_slice %143 {offsets = [0, 128], sizes = [8, 128], strides = [1, 1]} : vector<8x384xf32> to vector<8x128xf32>
    %154 = vector.extract_strided_slice %144 {offsets = [0, 128], sizes = [8, 128], strides = [1, 1]} : vector<8x384xf32> to vector<8x128xf32>
    %155 = arith.addf %153, %154 : vector<8x128xf32>
    %156 = arith.negf %155 : vector<8x128xf32>
    %157 = math.exp %156 : vector<8x128xf32>
    %cst_39 = arith.constant 1.000000e+00 : f32
    %158 = vector.broadcast %cst_39 : f32 to vector<8x128xf32>
    %159 = arith.addf %158, %157 : vector<8x128xf32>
    %160 = arith.divf %158, %159 : vector<8x128xf32>
    %161 = vector.extract_strided_slice %143 {offsets = [0, 256], sizes = [8, 128], strides = [1, 1]} : vector<8x384xf32> to vector<8x128xf32>
    %162 = vector.extract_strided_slice %144 {offsets = [0, 256], sizes = [8, 128], strides = [1, 1]} : vector<8x384xf32> to vector<8x128xf32>
    %163 = arith.addf %162, %10 : vector<8x128xf32>
    %164 = arith.mulf %152, %163 : vector<8x128xf32>
    %165 = arith.addf %161, %164 : vector<8x128xf32>
    %166 = math.tanh %165 : vector<8x128xf32>
    %cst_40 = arith.constant 1.000000e+00 : f32
    %167 = vector.broadcast %cst_40 : f32 to vector<8x128xf32>
    %168 = arith.subf %167, %160 : vector<8x128xf32>
    %169 = arith.mulf %168, %166 : vector<8x128xf32>
    %170 = arith.mulf %160, %139 : vector<8x128xf32>
    %171 = arith.addf %169, %170 : vector<8x128xf32>
    %c5_i32 = arith.constant 5 : i32
    %c8_i32_41 = arith.constant 8 : i32
    %172 = arith.muli %c5_i32, %c8_i32_41 : i32
    %173 = tpu.assume_multiple %172, 8 : i32
    %174 = arith.index_cast %173 : i32 to index
    %c0_42 = arith.constant 0 : index
    %175 = vector.load %arg9[%174, %c0_42] : memref<64x384xf32, #tpu.memory_space<vmem>>, vector<8x384xf32>
    %cst_43 = arith.constant dense<0.000000e+00> : vector<8x384xf32>
    %176 = tpu.matmul %171, %7, %cst_43 {dimension_numbers = #tpu.dot_dimension_numbers<[1], [0], [0], [1], [0, 0, 1, 1], [], []>} : vector<8x128xf32>, vector<128x384xf32>, vector<8x384xf32> -> vector<8x384xf32>
    %177 = vector.extract_strided_slice %175 {offsets = [0, 0], sizes = [8, 128], strides = [1, 1]} : vector<8x384xf32> to vector<8x128xf32>
    %178 = vector.extract_strided_slice %176 {offsets = [0, 0], sizes = [8, 128], strides = [1, 1]} : vector<8x384xf32> to vector<8x128xf32>
    %179 = arith.addf %177, %178 : vector<8x128xf32>
    %180 = arith.negf %179 : vector<8x128xf32>
    %181 = math.exp %180 : vector<8x128xf32>
    %cst_44 = arith.constant 1.000000e+00 : f32
    %182 = vector.broadcast %cst_44 : f32 to vector<8x128xf32>
    %183 = arith.addf %182, %181 : vector<8x128xf32>
    %184 = arith.divf %182, %183 : vector<8x128xf32>
    %185 = vector.extract_strided_slice %175 {offsets = [0, 128], sizes = [8, 128], strides = [1, 1]} : vector<8x384xf32> to vector<8x128xf32>
    %186 = vector.extract_strided_slice %176 {offsets = [0, 128], sizes = [8, 128], strides = [1, 1]} : vector<8x384xf32> to vector<8x128xf32>
    %187 = arith.addf %185, %186 : vector<8x128xf32>
    %188 = arith.negf %187 : vector<8x128xf32>
    %189 = math.exp %188 : vector<8x128xf32>
    %cst_45 = arith.constant 1.000000e+00 : f32
    %190 = vector.broadcast %cst_45 : f32 to vector<8x128xf32>
    %191 = arith.addf %190, %189 : vector<8x128xf32>
    %192 = arith.divf %190, %191 : vector<8x128xf32>
    %193 = vector.extract_strided_slice %175 {offsets = [0, 256], sizes = [8, 128], strides = [1, 1]} : vector<8x384xf32> to vector<8x128xf32>
    %194 = vector.extract_strided_slice %176 {offsets = [0, 256], sizes = [8, 128], strides = [1, 1]} : vector<8x384xf32> to vector<8x128xf32>
    %195 = arith.addf %194, %10 : vector<8x128xf32>
    %196 = arith.mulf %184, %195 : vector<8x128xf32>
    %197 = arith.addf %193, %196 : vector<8x128xf32>
    %198 = math.tanh %197 : vector<8x128xf32>
    %cst_46 = arith.constant 1.000000e+00 : f32
    %199 = vector.broadcast %cst_46 : f32 to vector<8x128xf32>
    %200 = arith.subf %199, %192 : vector<8x128xf32>
    %201 = arith.mulf %200, %198 : vector<8x128xf32>
    %202 = arith.mulf %192, %171 : vector<8x128xf32>
    %203 = arith.addf %201, %202 : vector<8x128xf32>
    %c6_i32 = arith.constant 6 : i32
    %c8_i32_47 = arith.constant 8 : i32
    %204 = arith.muli %c6_i32, %c8_i32_47 : i32
    %205 = tpu.assume_multiple %204, 8 : i32
    %206 = arith.index_cast %205 : i32 to index
    %c0_48 = arith.constant 0 : index
    %207 = vector.load %arg9[%206, %c0_48] : memref<64x384xf32, #tpu.memory_space<vmem>>, vector<8x384xf32>
    %cst_49 = arith.constant dense<0.000000e+00> : vector<8x384xf32>
    %208 = tpu.matmul %203, %7, %cst_49 {dimension_numbers = #tpu.dot_dimension_numbers<[1], [0], [0], [1], [0, 0, 1, 1], [], []>} : vector<8x128xf32>, vector<128x384xf32>, vector<8x384xf32> -> vector<8x384xf32>
    %209 = vector.extract_strided_slice %207 {offsets = [0, 0], sizes = [8, 128], strides = [1, 1]} : vector<8x384xf32> to vector<8x128xf32>
    %210 = vector.extract_strided_slice %208 {offsets = [0, 0], sizes = [8, 128], strides = [1, 1]} : vector<8x384xf32> to vector<8x128xf32>
    %211 = arith.addf %209, %210 : vector<8x128xf32>
    %212 = arith.negf %211 : vector<8x128xf32>
    %213 = math.exp %212 : vector<8x128xf32>
    %cst_50 = arith.constant 1.000000e+00 : f32
    %214 = vector.broadcast %cst_50 : f32 to vector<8x128xf32>
    %215 = arith.addf %214, %213 : vector<8x128xf32>
    %216 = arith.divf %214, %215 : vector<8x128xf32>
    %217 = vector.extract_strided_slice %207 {offsets = [0, 128], sizes = [8, 128], strides = [1, 1]} : vector<8x384xf32> to vector<8x128xf32>
    %218 = vector.extract_strided_slice %208 {offsets = [0, 128], sizes = [8, 128], strides = [1, 1]} : vector<8x384xf32> to vector<8x128xf32>
    %219 = arith.addf %217, %218 : vector<8x128xf32>
    %220 = arith.negf %219 : vector<8x128xf32>
    %221 = math.exp %220 : vector<8x128xf32>
    %cst_51 = arith.constant 1.000000e+00 : f32
    %222 = vector.broadcast %cst_51 : f32 to vector<8x128xf32>
    %223 = arith.addf %222, %221 : vector<8x128xf32>
    %224 = arith.divf %222, %223 : vector<8x128xf32>
    %225 = vector.extract_strided_slice %207 {offsets = [0, 256], sizes = [8, 128], strides = [1, 1]} : vector<8x384xf32> to vector<8x128xf32>
    %226 = vector.extract_strided_slice %208 {offsets = [0, 256], sizes = [8, 128], strides = [1, 1]} : vector<8x384xf32> to vector<8x128xf32>
    %227 = arith.addf %226, %10 : vector<8x128xf32>
    %228 = arith.mulf %216, %227 : vector<8x128xf32>
    %229 = arith.addf %225, %228 : vector<8x128xf32>
    %230 = math.tanh %229 : vector<8x128xf32>
    %cst_52 = arith.constant 1.000000e+00 : f32
    %231 = vector.broadcast %cst_52 : f32 to vector<8x128xf32>
    %232 = arith.subf %231, %224 : vector<8x128xf32>
    %233 = arith.mulf %232, %230 : vector<8x128xf32>
    %234 = arith.mulf %224, %203 : vector<8x128xf32>
    %235 = arith.addf %233, %234 : vector<8x128xf32>
    %c7_i32 = arith.constant 7 : i32
    %c8_i32_53 = arith.constant 8 : i32
    %236 = arith.muli %c7_i32, %c8_i32_53 : i32
    %237 = tpu.assume_multiple %236, 8 : i32
    %238 = arith.index_cast %237 : i32 to index
    %c0_54 = arith.constant 0 : index
    %239 = vector.load %arg9[%238, %c0_54] : memref<64x384xf32, #tpu.memory_space<vmem>>, vector<8x384xf32>
    %cst_55 = arith.constant dense<0.000000e+00> : vector<8x384xf32>
    %240 = tpu.matmul %235, %7, %cst_55 {dimension_numbers = #tpu.dot_dimension_numbers<[1], [0], [0], [1], [0, 0, 1, 1], [], []>} : vector<8x128xf32>, vector<128x384xf32>, vector<8x384xf32> -> vector<8x384xf32>
    %241 = vector.extract_strided_slice %239 {offsets = [0, 0], sizes = [8, 128], strides = [1, 1]} : vector<8x384xf32> to vector<8x128xf32>
    %242 = vector.extract_strided_slice %240 {offsets = [0, 0], sizes = [8, 128], strides = [1, 1]} : vector<8x384xf32> to vector<8x128xf32>
    %243 = arith.addf %241, %242 : vector<8x128xf32>
    %244 = arith.negf %243 : vector<8x128xf32>
    %245 = math.exp %244 : vector<8x128xf32>
    %cst_56 = arith.constant 1.000000e+00 : f32
    %246 = vector.broadcast %cst_56 : f32 to vector<8x128xf32>
    %247 = arith.addf %246, %245 : vector<8x128xf32>
    %248 = arith.divf %246, %247 : vector<8x128xf32>
    %249 = vector.extract_strided_slice %239 {offsets = [0, 128], sizes = [8, 128], strides = [1, 1]} : vector<8x384xf32> to vector<8x128xf32>
    %250 = vector.extract_strided_slice %240 {offsets = [0, 128], sizes = [8, 128], strides = [1, 1]} : vector<8x384xf32> to vector<8x128xf32>
    %251 = arith.addf %249, %250 : vector<8x128xf32>
    %252 = arith.negf %251 : vector<8x128xf32>
    %253 = math.exp %252 : vector<8x128xf32>
    %cst_57 = arith.constant 1.000000e+00 : f32
    %254 = vector.broadcast %cst_57 : f32 to vector<8x128xf32>
    %255 = arith.addf %254, %253 : vector<8x128xf32>
    %256 = arith.divf %254, %255 : vector<8x128xf32>
    %257 = vector.extract_strided_slice %239 {offsets = [0, 256], sizes = [8, 128], strides = [1, 1]} : vector<8x384xf32> to vector<8x128xf32>
    %258 = vector.extract_strided_slice %240 {offsets = [0, 256], sizes = [8, 128], strides = [1, 1]} : vector<8x384xf32> to vector<8x128xf32>
    %259 = arith.addf %258, %10 : vector<8x128xf32>
    %260 = arith.mulf %248, %259 : vector<8x128xf32>
    %261 = arith.addf %257, %260 : vector<8x128xf32>
    %262 = math.tanh %261 : vector<8x128xf32>
    %cst_58 = arith.constant 1.000000e+00 : f32
    %263 = vector.broadcast %cst_58 : f32 to vector<8x128xf32>
    %264 = arith.subf %263, %256 : vector<8x128xf32>
    %265 = arith.mulf %264, %262 : vector<8x128xf32>
    %266 = arith.mulf %256, %235 : vector<8x128xf32>
    %267 = arith.addf %265, %266 : vector<8x128xf32>
    %c8_i32_59 = arith.constant 8 : i32
    %c0_60 = arith.constant 0 : index
    %c0_61 = arith.constant 0 : index
    %268 = vector.load %arg6[%c0_60, %c0_61] : memref<128x128xf32, #tpu.memory_space<vmem>>, vector<128x128xf32>
    %cst_62 = arith.constant dense<0.000000e+00> : vector<8x128xf32>
    %269 = tpu.matmul %267, %268, %cst_62 {dimension_numbers = #tpu.dot_dimension_numbers<[1], [0], [0], [1], [0, 0, 1, 1], [], []>} : vector<8x128xf32>, vector<128x128xf32>, vector<8x128xf32> -> vector<8x128xf32>
    %c0_63 = arith.constant 0 : index
    %c0_64 = arith.constant 0 : index
    %270 = vector.load %arg7[%c0_63, %c0_64] : memref<1x128xf32, #tpu.memory_space<vmem>>, vector<1x128xf32>
    %271 = vector.broadcast %270 : vector<1x128xf32> to vector<8x128xf32>
    %272 = arith.addf %269, %271 : vector<8x128xf32>
    %cst_65 = arith.constant dense<0xFF800000> : vector<8xf32>
    %273 = vector.multi_reduction <maximumf>, %272, %cst_65 [1] : vector<8x128xf32> to vector<8xf32>
    %274 = vector.shape_cast %273 : vector<8xf32> to vector<8x1xf32>
    %275 = vector.broadcast %274 : vector<8x1xf32> to vector<8x128xf32>
    %276 = arith.subf %272, %275 : vector<8x128xf32>
    %277 = math.exp %276 : vector<8x128xf32>
    %cst_66 = arith.constant dense<0.000000e+00> : vector<8xf32>
    %278 = vector.multi_reduction <add>, %277, %cst_66 [1] : vector<8x128xf32> to vector<8xf32>
    %279 = vector.shape_cast %278 : vector<8xf32> to vector<8x1xf32>
    %280 = math.log %279 : vector<8x1xf32>
    %281 = vector.broadcast %280 : vector<8x1xf32> to vector<8x128xf32>
    %282 = arith.subf %276, %281 : vector<8x128xf32>
    %c0_67 = arith.constant 0 : index
    %c0_68 = arith.constant 0 : index
    %283 = vector.load %arg8[%c0_67, %c0_68] : memref<8x128xf32, #tpu.memory_space<vmem>>, vector<8x128xf32>
    tpu.vector_store %arg8[%c0_67, %c0_68], %282 {strides = array<i32>} : memref<8x128xf32, #tpu.memory_space<vmem>>, vector<8x128xf32>,
    return
  }
  func.func @transform_0(%arg0: i32) -> (i32, i32) {
    %c0_i32 = arith.constant 0 : i32
    %c0_i32_0 = arith.constant 0 : i32
    %c0_i32_1 = arith.constant 0 : i32
    return %c0_i32, %c0_i32_0 : i32, i32
  }
  func.func @transform_1(%arg0: i32) -> (i32, i32) {
    %c0_i32 = arith.constant 0 : i32
    %c0_i32_0 = arith.constant 0 : i32
    %c0_i32_1 = arith.constant 0 : i32
    return %c0_i32, %c0_i32_0 : i32, i32
  }
  func.func @transform_2(%arg0: i32) -> (i32, i32) {
    %c0_i32 = arith.constant 0 : i32
    %c0_i32_0 = arith.constant 0 : i32
    %c0_i32_1 = arith.constant 0 : i32
    return %c0_i32, %c0_i32_0 : i32, i32
  }
  func.func @transform_3(%arg0: i32) -> (i32, i32) {
    %c0_i32 = arith.constant 0 : i32
    %c0_i32_0 = arith.constant 0 : i32
    %c0_i32_1 = arith.constant 0 : i32
    return %c0_i32, %c0_i32_0 : i32, i32
  }
  func.func @transform_4(%arg0: i32) -> (i32, i32) {
    %c0_i32 = arith.constant 0 : i32
    %c0_i32_0 = arith.constant 0 : i32
    %c0_i32_1 = arith.constant 0 : i32
    return %c0_i32, %c0_i32_0 : i32, i32
  }
  func.func @transform_5(%arg0: i32) -> (i32, i32) {
    %c0_i32 = arith.constant 0 : i32
    %c0_i32_0 = arith.constant 0 : i32
    %c0_i32_1 = arith.constant 0 : i32
    return %c0_i32, %c0_i32_0 : i32, i32
  }
  func.func @transform_6(%arg0: i32) -> (i32, i32) {
    %c0_i32 = arith.constant 0 : i32
    %c0_i32_0 = arith.constant 0 : i32
    %c0_i32_1 = arith.constant 0 : i32
    return %c0_i32, %c0_i32_0 : i32, i32
  }
  func.func @transform_7(%arg0: i32) -> (i32, i32) {
    %c0_i32 = arith.constant 0 : i32
    %c0_i32_0 = arith.constant 0 : i32
    %c0_i32_1 = arith.constant 0 : i32
    return %c0_i32, %c0_i32_0 : i32, i32
  }
}

</mosaic_0001>

<llo_original>
// kernel: tpu_custom_call.1
$region0: #{tpu_custom_call.1}
  #allocation0 [shape = 'u32[]', space=smem, size = 0x4, offset = 0x4, fixed_abs, tag = 'smem constant byte address 0x4 - core index']
  #allocation1 [shape = 'u32[144,128]{1,0:T(1,128)}', space=vmem, size = 0x12000, scoped, tag = 'internal scratch']
  #allocation2 [shape = 'f32[64,384]{1,0:T(8,128)}', space=vmem, size = 0x18000, scoped, tag = 'scratch operand']
  %s0 = inlined_call_operand.hbm [shape: f32[64,128], index: 0, kind: input, shape index: {}]
  %s1 = inlined_call_operand.hbm [shape: f32[128,384], index: 1, kind: input, shape index: {}]
  %s2 = inlined_call_operand.hbm [shape: f32[128,384], index: 2, kind: input, shape index: {}]
  %s3 = inlined_call_operand.vmem [shape: f32[1,384], index: 3, kind: input, shape index: {}]
  %s4 = inlined_call_operand.vmem [shape: f32[1,128], index: 4, kind: input, shape index: {}]
  %s5 = inlined_call_operand.hbm [shape: f32[128,128], index: 5, kind: input, shape index: {}]
  %s6 = inlined_call_operand.vmem [shape: f32[1,128], index: 6, kind: input, shape index: {}]
  %s7 = inlined_call_operand.hbm [shape: f32[8,128], index: 7, kind: output, shape index: {}]
  %s8 = sld [smem:[#allocation0]]
  $region54: #{tpu_custom_call.1} parent=0
    _
  %s10 = ssub.s32 1, %s8
  %s11 = scalar_select 0, %s10, %s8
  $region1: #{tpu_custom_call.1} parent=0
    #allocation3 [shape = 'u8[32768]{0}', space=vmem, size = 0x8000, scoped, tag = 'input window, operand 0, single buffered']
    #allocation4 [shape = 's32[1]{0}', space=sflag, size = 0x4, scoped, tag = 'scoped memory for tpu_custom_call.1']
    #allocation5 [shape = 's32[1]{0}', space=sflag, size = 0x4, scoped, tag = 'scoped memory for tpu_custom_call.1']
    #allocation6 [shape = 'u8[196608]{0}', space=vmem, size = 0x30000, scoped, tag = 'input window, operand 1, single buffered']
    #allocation7 [shape = 's32[1]{0}', space=sflag, size = 0x4, scoped, tag = 'scoped memory for tpu_custom_call.1']
    #allocation8 [shape = 'u8[196608]{0}', space=vmem, size = 0x30000, scoped, tag = 'input window, operand 2, single buffered']
    #allocation9 [shape = 'u8[65536]{0}', space=vmem, size = 0x10000, scoped, tag = 'input window, operand 5, single buffered']
    #allocation10 [shape = 's32[1]{0}', space=sflag, size = 0x4, scoped, tag = 'scoped memory for tpu_custom_call.1']
    #allocation11 [shape = 'u8[4096]{0}', space=vmem, size = 0x1000, scoped, tag = 'output window, operand 0, single buffered']
    %12 = vsyncpa [#allocation4], 0
    %13 = vsyncpa [#allocation7], 0
    %14 = vsyncpa [#allocation10], 0
    %15 = vsyncpa [#allocation5], 0
    // Predicated region
    $region2: #{tpu_custom_call.1} parent=1 // pred_check
      _
    $region3: #{tpu_custom_call.1} parent=1 // pred_check_branch
      %17 = sbr.rel (0) target = $region5
    $region4: #{tpu_custom_call.1} parent=1 // pred_region
      %s19 = ssub.s32 1024, 1024
      %20 = vsyncadd [#allocation4], %s19
      %s21 = sshll.u32 [#allocation3], 4
      %s22 = int_to_ptr.vmem [resolvable:$true] %s21
      %27 = dma.hbm_to_vmem [thread:$0]  %s0, 1024, %s22, [#allocation4], 128, 128, 8
    $region5: #{tpu_custom_call.1} parent=1 // pred_fallthru
      _
    // Predicated region
    $region6: #{tpu_custom_call.1} parent=1 // pred_check
      _
    $region7: #{tpu_custom_call.1} parent=1 // pred_check_branch
      %29 = sbr.rel (0) target = $region9
    $region8: #{tpu_custom_call.1} parent=1 // pred_region
      %s31 = ssub.s32 6144, 6144
      %32 = vsyncadd [#allocation7], %s31
      %s33 = sshll.u32 [#allocation6], 4
      %s34 = int_to_ptr.vmem [resolvable:$true] %s33
      %39 = dma.hbm_to_vmem [thread:$0]  %s1, 6144, %s34, [#allocation7], 384, 384, 24
    $region9: #{tpu_custom_call.1} parent=1 // pred_fallthru
      _
    // Predicated region
    $region10: #{tpu_custom_call.1} parent=1 // pred_check
      _
    $region11: #{tpu_custom_call.1} parent=1 // pred_check_branch
      %41 = sbr.rel (0) target = $region13
    $region12: #{tpu_custom_call.1} parent=1 // pred_region
      %s43 = ssub.s32 6144, 6144
      %44 = vsyncadd [#allocation7], %s43
      %s45 = sshll.u32 [#allocation8], 4
      %s46 = int_to_ptr.vmem [resolvable:$true] %s45
      %51 = dma.hbm_to_vmem [thread:$0]  %s2, 6144, %s46, [#allocation7], 384, 384, 24
    $region13: #{tpu_custom_call.1} parent=1 // pred_fallthru
      _
    // Predicated region
    $region14: #{tpu_custom_call.1} parent=1 // pred_check
      _
    $region15: #{tpu_custom_call.1} parent=1 // pred_check_branch
      %53 = sbr.rel (0) target = $region17
    $region16: #{tpu_custom_call.1} parent=1 // pred_region
      _
    $region17: #{tpu_custom_call.1} parent=1 // pred_fallthru
      _
    // Predicated region
    $region18: #{tpu_custom_call.1} parent=1 // pred_check
      _
    $region19: #{tpu_custom_call.1} parent=1 // pred_check_branch
      %55 = sbr.rel (0) target = $region21
    $region20: #{tpu_custom_call.1} parent=1 // pred_region
      _
    $region21: #{tpu_custom_call.1} parent=1 // pred_fallthru
      _
    // Predicated region
    $region22: #{tpu_custom_call.1} parent=1 // pred_check
      _
    $region23: #{tpu_custom_call.1} parent=1 // pred_check_branch
      %57 = sbr.rel (0) target = $region25
    $region24: #{tpu_custom_call.1} parent=1 // pred_region
      %s59 = ssub.s32 2048, 2048
      %60 = vsyncadd [#allocation10], %s59
      %s61 = sshll.u32 [#allocation9], 4
      %s62 = int_to_ptr.vmem [resolvable:$true] %s61
      %67 = dma.hbm_to_vmem [thread:$0]  %s5, 2048, %s62, [#allocation10], 128, 128, 8
    $region25: #{tpu_custom_call.1} parent=1 // pred_fallthru
      _
    // Predicated region
    $region26: #{tpu_custom_call.1} parent=1 // pred_check
      _
    $region27: #{tpu_custom_call.1} parent=1 // pred_check_branch
      %69 = sbr.rel (0) target = $region29
    $region28: #{tpu_custom_call.1} parent=1 // pred_region
      _
    $region29: #{tpu_custom_call.1} parent=1 // pred_fallthru
      _
    // Predicated region
    $region30: #{tpu_custom_call.1} parent=1 // pred_check
      _
    $region31: #{tpu_custom_call.1} parent=1 // pred_check_branch
      %71 = sbr.rel (0) target = $region33
    $region32: #{tpu_custom_call.1} parent=1 // pred_region
      %72 = dma.done [#allocation4], 1024
    $region33: #{tpu_custom_call.1} parent=1 // pred_fallthru
      _
    // Predicated region
    $region34: #{tpu_custom_call.1} parent=1 // pred_check
      _
    $region35: #{tpu_custom_call.1} parent=1 // pred_check_branch
      %74 = sbr.rel (0) target = $region37
    $region36: #{tpu_custom_call.1} parent=1 // pred_region
      %75 = dma.done [#allocation7], 6144
    $region37: #{tpu_custom_call.1} parent=1 // pred_fallthru
      _
    // Predicated region
    $region38: #{tpu_custom_call.1} parent=1 // pred_check
      _
    $region39: #{tpu_custom_call.1} parent=1 // pred_check_branch
      %77 = sbr.rel (0) target = $region41
    $region40: #{tpu_custom_call.1} parent=1 // pred_region
      %78 = dma.done [#allocation7], 6144
    $region41: #{tpu_custom_call.1} parent=1 // pred_fallthru
      _
    // Predicated region
    $region42: #{tpu_custom_call.1} parent=1 // pred_check
      _
    $region43: #{tpu_custom_call.1} parent=1 // pred_check_branch
      %80 = sbr.rel (0) target = $region45
    $region44: #{tpu_custom_call.1} parent=1 // pred_region
      %81 = dma.done [#allocation10], 2048
    $region45: #{tpu_custom_call.1} parent=1 // pred_fallthru
      _
    %v82 = vld [vmem:[#allocation3] sm:$0xff]
    %v83 = vld [vmem:[#allocation3 + $0x8] sm:$0xff]
    %v84 = vld [vmem:[#allocation3 + $0x10] sm:$0xff]
    %v85 = vld [vmem:[#allocation3 + $0x18] sm:$0xff]
    %v86 = vld [vmem:[#allocation3 + $0x20] sm:$0xff]
    %v87 = vld [vmem:[#allocation3 + $0x28] sm:$0xff]
    %v88 = vld [vmem:[#allocation3 + $0x30] sm:$0xff]
    %v89 = vld [vmem:[#allocation3 + $0x38] sm:$0xff]
    %v90 = vld [vmem:[#allocation6] sm:$0xff]
    %v91 = vld [vmem:[#allocation6 + $0x8] sm:$0xff]
    %v92 = vld [vmem:[#allocation6 + $0x10] sm:$0xff]
    %v93 = vld [vmem:[#allocation6 + $0x18] sm:$0xff]
    %v94 = vld [vmem:[#allocation6 + $0x20] sm:$0xff]
    %v95 = vld [vmem:[#allocation6 + $0x28] sm:$0xff]
    %v96 = vld [vmem:[#allocation6 + $0x30] sm:$0xff]
    %v97 = vld [vmem:[#allocation6 + $0x38] sm:$0xff]
    %v98 = vld [vmem:[#allocation6 + $0x40] sm:$0xff]
    %v99 = vld [vmem:[#allocation6 + $0x48] sm:$0xff]
    %v100 = vld [vmem:[#allocation6 + $0x50] sm:$0xff]
    %v101 = vld [vmem:[#allocation6 + $0x58] sm:$0xff]
    %v102 = vld [vmem:[#allocation6 + $0x60] sm:$0xff]
    %v103 = vld [vmem:[#allocation6 + $0x68] sm:$0xff]
    %v104 = vld [vmem:[#allocation6 + $0x70] sm:$0xff]
    %v105 = vld [vmem:[#allocation6 + $0x78] sm:$0xff]
    %v106 = vld [vmem:[#allocation6 + $0x80] sm:$0xff]
    %v107 = vld [vmem:[#allocation6 + $0x88] sm:$0xff]
    %v108 = vld [vmem:[#allocation6 + $0x90] sm:$0xff]
    %v109 = vld [vmem:[#allocation6 + $0x98] sm:$0xff]
    %v110 = vld [vmem:[#allocation6 + $0xa0] sm:$0xff]
    %v111 = vld [vmem:[#allocation6 + $0xa8] sm:$0xff]
    %v112 = vld [vmem:[#allocation6 + $0xb0] sm:$0xff]
    %v113 = vld [vmem:[#allocation6 + $0xb8] sm:$0xff]
    %v114 = vld [vmem:[#allocation6 + $0xc0] sm:$0xff]
    %v115 = vld [vmem:[#allocation6 + $0xc8] sm:$0xff]
    %v116 = vld [vmem:[#allocation6 + $0xd0] sm:$0xff]
    %v117 = vld [vmem:[#allocation6 + $0xd8] sm:$0xff]
    %v118 = vld [vmem:[#allocation6 + $0xe0] sm:$0xff]
    %v119 = vld [vmem:[#allocation6 + $0xe8] sm:$0xff]
    %v120 = vld [vmem:[#allocation6 + $0xf0] sm:$0xff]
    %v121 = vld [vmem:[#allocation6 + $0xf8] sm:$0xff]
    %v122 = vld [vmem:[#allocation6 + $0x100] sm:$0xff]
    %v123 = vld [vmem:[#allocation6 + $0x108] sm:$0xff]
    %v124 = vld [vmem:[#allocation6 + $0x110] sm:$0xff]
    %v125 = vld [vmem:[#allocation6 + $0x118] sm:$0xff]
    %v126 = vld [vmem:[#allocation6 + $0x120] sm:$0xff]
    %v127 = vld [vmem:[#allocation6 + $0x128] sm:$0xff]
    %v128 = vld [vmem:[#allocation6 + $0x130] sm:$0xff]
    %v129 = vld [vmem:[#allocation6 + $0x138] sm:$0xff]
    %v130 = vld [vmem:[#allocation6 + $0x140] sm:$0xff]
    %v131 = vld [vmem:[#allocation6 + $0x148] sm:$0xff]
    %v132 = vld [vmem:[#allocation6 + $0x150] sm:$0xff]
    %v133 = vld [vmem:[#allocation6 + $0x158] sm:$0xff]
    %v134 = vld [vmem:[#allocation6 + $0x160] sm:$0xff]
    %v135 = vld [vmem:[#allocation6 + $0x168] sm:$0xff]
    %v136 = vld [vmem:[#allocation6 + $0x170] sm:$0xff]
    %v137 = vld [vmem:[#allocation6 + $0x178] sm:$0xff]
    %v138 = vld [vmem:[%s3] sm:$0x7]
    %v140 = vlaneseq
    %v141 = vshrl.u32 %v140, 7
    %v142 = vsub.s32 0, %v141
    %v143 = vrot.slane %v138, %v142
    %v144 = vlaneseq
    %v145 = vshrl.u32 %v144, 7
    %v146 = vsub.s32 1, %v145
    %v147 = vrot.slane %v138, %v146
    %v148 = vlaneseq
    %v149 = vshrl.u32 %v148, 7
    %v150 = vsub.s32 2, %v149
    %v151 = vrot.slane %v138, %v150
    %155 = vmatprep.subr.mxu0 %v91
    %156 = vmatpush1.msra.mxu0 %v90
    %157 = vmatprep.subr.mxu0 %v94
    %158 = vmatpush1.msra.mxu0 %v93
    %159 = vmatprep.subr.mxu0 %v97
    %160 = vmatpush1.msra.mxu0 %v96
    %161 = vmatprep.subr.mxu0 %v100
    %162 = vmatpush1.msra.mxu0 %v99
    %163 = vmatprep.subr.mxu0 %v103
    %164 = vmatpush1.msra.mxu0 %v102
    %165 = vmatprep.subr.mxu0 %v106
    %166 = vmatpush1.msra.mxu0 %v105
    %167 = vmatprep.subr.mxu0 %v109
    %168 = vmatpush1.msra.mxu0 %v108
    %169 = vmatprep.subr.mxu0 %v112
    %170 = vmatpush1.msra.mxu0 %v111
    %171 = vmatprep.subr.mxu0 %v115
    %172 = vmatpush1.msra.mxu0 %v114
    %173 = vmatprep.subr.mxu0 %v118
    %174 = vmatpush1.msra.mxu0 %v117
    %175 = vmatprep.subr.mxu0 %v121
    %176 = vmatpush1.msra.mxu0 %v120
    %177 = vmatprep.subr.mxu0 %v124
    %178 = vmatpush1.msra.mxu0 %v123
    %179 = vmatprep.subr.mxu0 %v127
    %180 = vmatpush1.msra.mxu0 %v126
    %181 = vmatprep.subr.mxu0 %v130
    %182 = vmatpush1.msra.mxu0 %v129
    %183 = vmatprep.subr.mxu0 %v133
    %184 = vmatpush1.msra.mxu0 %v132
    %185 = vmatprep.subr.mxu0 %v136
    %186 = vmatpush1.msra.mxu0 %v135
    %187 = vmatprep.subr.mxu0 0.0
    %188 = vmatpush1.msra.mxu0 0.0
    %189 = vmatprep.subr.mxu0 0.0
    %190 = vmatpush1.msra.mxu0 0.0
    %191 = vmatprep.subr.mxu0 0.0
    %192 = vmatpush1.msra.mxu0 0.0
    %193 = vmatprep.subr.mxu0 0.0
    %194 = vmatpush1.msra.mxu0 0.0
    %195 = vmatprep.subr.mxu0 0.0
    %196 = vmatpush1.msra.mxu0 0.0
    %197 = vmatprep.subr.mxu0 0.0
    %198 = vmatpush1.msra.mxu0 0.0
    %199 = vmatprep.subr.mxu0 0.0
    %200 = vmatpush1.msra.mxu0 0.0
    %201 = vmatprep.subr.mxu0 0.0
    %202 = vmatpush1.msra.mxu0 0.0
    %203 = vmatprep.subr.mxu0 0.0
    %204 = vmatpush1.msra.mxu0 0.0
    %205 = vmatprep.subr.mxu0 0.0
    %206 = vmatpush1.msra.mxu0 0.0
    %207 = vmatprep.subr.mxu0 0.0
    %208 = vmatpush1.msra.mxu0 0.0
    %209 = vmatprep.subr.mxu0 0.0
    %210 = vmatpush1.msra.mxu0 0.0
    %211 = vmatprep.subr.mxu0 0.0
    %212 = vmatpush1.msra.mxu0 0.0
    %213 = vmatprep.subr.mxu0 0.0
    %214 = vmatpush1.msra.mxu0 0.0
    %215 = vmatprep.subr.mxu0 0.0
    %216 = vmatpush1.msra.mxu0 0.0
    %217 = vmatprep.subr.mxu0 0.0
    %218 = vmatpush1.msra.mxu0 0.0
    %219 = vmatprep.mubr.f32.mxu0 0.0
    %220 = vmatmul.mubr.f32.gmra.mrb[0].mxu0 %v82
    %v221 = vpop.f32.mrb[0].mxu0
    %v222 = vadd.f32 %v143, %v221
    %v223 = vpop.f32.mrb[0].mxu0
    %v224 = vadd.f32 %v147, %v223
    %225 = vmatprep.mubr.f32.mxu0 0.0
    %226 = vmatmul.mubr.f32.gmra.mrb[0].mxu0 %v83
    %v227 = vpop.f32.mrb[0].mxu0
    %v228 = vadd.f32 %v143, %v227
    %v229 = vpop.f32.mrb[0].mxu0
    %v230 = vadd.f32 %v147, %v229
    %231 = vmatprep.mubr.f32.mxu0 0.0
    %232 = vmatmul.mubr.f32.gmra.mrb[0].mxu0 %v84
    %v233 = vpop.f32.mrb[0].mxu0
    %v234 = vadd.f32 %v143, %v233
    %v235 = vpop.f32.mrb[0].mxu0
    %v236 = vadd.f32 %v147, %v235
    %237 = vmatprep.mubr.f32.mxu0 0.0
    %238 = vmatmul.mubr.f32.gmra.mrb[0].mxu0 %v85
    %v239 = vpop.f32.mrb[0].mxu0
    %v240 = vadd.f32 %v143, %v239
    %v241 = vpop.f32.mrb[0].mxu0
    %v242 = vadd.f32 %v147, %v241
    %243 = vmatprep.mubr.f32.mxu0 0.0
    %244 = vmatmul.mubr.f32.gmra.mrb[0].mxu0 %v86
    %v245 = vpop.f32.mrb[0].mxu0
    %v246 = vadd.f32 %v143, %v245
    %v247 = vpop.f32.mrb[0].mxu0
    %v248 = vadd.f32 %v147, %v247
    %249 = vmatprep.mubr.f32.mxu0 0.0
    %250 = vmatmul.mubr.f32.gmra.mrb[0].mxu0 %v87
    %v251 = vpop.f32.mrb[0].mxu0
    %v252 = vadd.f32 %v143, %v251
    %v253 = vpop.f32.mrb[0].mxu0
    %v254 = vadd.f32 %v147, %v253
    %255 = vmatprep.mubr.f32.mxu0 0.0
    %256 = vmatmul.mubr.f32.gmra.mrb[0].mxu0 %v88
    %v257 = vpop.f32.mrb[0].mxu0
    %v258 = vadd.f32 %v143, %v257
    %v259 = vpop.f32.mrb[0].mxu0
    %v260 = vadd.f32 %v147, %v259
    %261 = vmatprep.mubr.f32.mxu0 0.0
    %262 = vmatmul.mubr.f32.gmra.mrb[0].mxu0 %v89
    %v263 = vpop.f32.mrb[0].mxu0
    %v264 = vadd.f32 %v143, %v263
    %v265 = vpop.f32.mrb[0].mxu0
    %v266 = vadd.f32 %v147, %v265
    %267 = vdwg.mxu0
    %268 = vmatprep.subr.mxu0 0.0
    %269 = vmatpush1.msra.mxu0 %v92
    %270 = vmatprep.subr.mxu0 0.0
    %271 = vmatpush1.msra.mxu0 %v95
    %272 = vmatprep.subr.mxu0 0.0
    %273 = vmatpush1.msra.mxu0 %v98
    %274 = vmatprep.subr.mxu0 0.0
    %275 = vmatpush1.msra.mxu0 %v101
    %276 = vmatprep.subr.mxu0 0.0
    %277 = vmatpush1.msra.mxu0 %v104
    %278 = vmatprep.subr.mxu0 0.0
    %279 = vmatpush1.msra.mxu0 %v107
    %280 = vmatprep.subr.mxu0 0.0
    %281 = vmatpush1.msra.mxu0 %v110
    %282 = vmatprep.subr.mxu0 0.0
    %283 = vmatpush1.msra.mxu0 %v113
    %284 = vmatprep.subr.mxu0 0.0
    %285 = vmatpush1.msra.mxu0 %v116
    %286 = vmatprep.subr.mxu0 0.0
    %287 = vmatpush1.msra.mxu0 %v119
    %288 = vmatprep.subr.mxu0 0.0
    %289 = vmatpush1.msra.mxu0 %v122
    %290 = vmatprep.subr.mxu0 0.0
    %291 = vmatpush1.msra.mxu0 %v125
    %292 = vmatprep.subr.mxu0 0.0
    %293 = vmatpush1.msra.mxu0 %v128
    %294 = vmatprep.subr.mxu0 0.0
    %295 = vmatpush1.msra.mxu0 %v131
    %296 = vmatprep.subr.mxu0 0.0
    %297 = vmatpush1.msra.mxu0 %v134
    %298 = vmatprep.subr.mxu0 0.0
    %299 = vmatpush1.msra.mxu0 %v137
    %300 = vmatprep.subr.mxu0 0.0
    %301 = vmatpush1.msra.mxu0 0.0
    %302 = vmatprep.subr.mxu0 0.0
    %303 = vmatpush1.msra.mxu0 0.0
    %304 = vmatprep.subr.mxu0 0.0
    %305 = vmatpush1.msra.mxu0 0.0
    %306 = vmatprep.subr.mxu0 0.0
    %307 = vmatpush1.msra.mxu0 0.0
    %308 = vmatprep.subr.mxu0 0.0
    %309 = vmatpush1.msra.mxu0 0.0
    %310 = vmatprep.subr.mxu0 0.0
    %311 = vmatpush1.msra.mxu0 0.0
    %312 = vmatprep.subr.mxu0 0.0
    %313 = vmatpush1.msra.mxu0 0.0
    %314 = vmatprep.subr.mxu0 0.0
    %315 = vmatpush1.msra.mxu0 0.0
    %316 = vmatprep.subr.mxu0 0.0
    %317 = vmatpush1.msra.mxu0 0.0
    %318 = vmatprep.subr.mxu0 0.0
    %319 = vmatpush1.msra.mxu0 0.0
    %320 = vmatprep.subr.mxu0 0.0
    %321 = vmatpush1.msra.mxu0 0.0
    %322 = vmatprep.subr.mxu0 0.0
    %323 = vmatpush1.msra.mxu0 0.0
    %324 = vmatprep.subr.mxu0 0.0
    %325 = vmatpush1.msra.mxu0 0.0
    %326 = vmatprep.subr.mxu0 0.0
    %327 = vmatpush1.msra.mxu0 0.0
    %328 = vmatprep.subr.mxu0 0.0
    %329 = vmatpush1.msra.mxu0 0.0
    %330 = vmatprep.subr.mxu0 0.0
    %331 = vmatpush1.msra.mxu0 0.0
    %332 = vmatprep.mubr.f32.mxu0 0.0
    %333 = vmatmul.mubr.f32.gmra.mrb[0].mxu0 %v82
    %v334 = vpop.f32.mrb[0].mxu0
    %v335 = vadd.f32 %v151, %v334
    %v336 = vpop.f32.mrb[0].mxu0
    %337 = vmatprep.mubr.f32.mxu0 0.0
    %338 = vmatmul.mubr.f32.gmra.mrb[0].mxu0 %v83
    %v339 = vpop.f32.mrb[0].mxu0
    %v340 = vadd.f32 %v151, %v339
    %v341 = vpop.f32.mrb[0].mxu0
    %342 = vmatprep.mubr.f32.mxu0 0.0
    %343 = vmatmul.mubr.f32.gmra.mrb[0].mxu0 %v84
    %v344 = vpop.f32.mrb[0].mxu0
    %v345 = vadd.f32 %v151, %v344
    %v346 = vpop.f32.mrb[0].mxu0
    %347 = vmatprep.mubr.f32.mxu0 0.0
    %348 = vmatmul.mubr.f32.gmra.mrb[0].mxu0 %v85
    %v349 = vpop.f32.mrb[0].mxu0
    %v350 = vadd.f32 %v151, %v349
    %v351 = vpop.f32.mrb[0].mxu0
    %352 = vmatprep.mubr.f32.mxu0 0.0
    %353 = vmatmul.mubr.f32.gmra.mrb[0].mxu0 %v86
    %v354 = vpop.f32.mrb[0].mxu0
    %v355 = vadd.f32 %v151, %v354
    %v356 = vpop.f32.mrb[0].mxu0
    %357 = vmatprep.mubr.f32.mxu0 0.0
    %358 = vmatmul.mubr.f32.gmra.mrb[0].mxu0 %v87
    %v359 = vpop.f32.mrb[0].mxu0
    %v360 = vadd.f32 %v151, %v359
    %v361 = vpop.f32.mrb[0].mxu0
    %362 = vmatprep.mubr.f32.mxu0 0.0
    %363 = vmatmul.mubr.f32.gmra.mrb[0].mxu0 %v88
    %v364 = vpop.f32.mrb[0].mxu0
    %v365 = vadd.f32 %v151, %v364
    %v366 = vpop.f32.mrb[0].mxu0
    %367 = vmatprep.mubr.f32.mxu0 0.0
    %368 = vmatmul.mubr.f32.gmra.mrb[0].mxu0 %v89
    %v369 = vpop.f32.mrb[0].mxu0
    %v370 = vadd.f32 %v151, %v369
    %v371 = vpop.f32.mrb[0].mxu0
    %372 = vdwg.mxu0
    %373 = vst [vmem:[#allocation2] sm:$0xff] %v222
    %374 = vst [vmem:[#allocation2 + $0x8] sm:$0xff] %v224
    %375 = vst [vmem:[#allocation2 + $0x10] sm:$0xff] %v335
    %376 = vst [vmem:[#allocation2 + $0x18] sm:$0xff] %v228
    %377 = vst [vmem:[#allocation2 + $0x20] sm:$0xff] %v230
    %378 = vst [vmem:[#allocation2 + $0x28] sm:$0xff] %v340
    %379 = vst [vmem:[#allocation2 + $0x30] sm:$0xff] %v234
    %380 = vst [vmem:[#allocation2 + $0x38] sm:$0xff] %v236
    %381 = vst [vmem:[#allocation2 + $0x40] sm:$0xff] %v345
    %382 = vst [vmem:[#allocation2 + $0x48] sm:$0xff] %v240
    %383 = vst [vmem:[#allocation2 + $0x50] sm:$0xff] %v242
    %384 = vst [vmem:[#allocation2 + $0x58] sm:$0xff] %v350
    %385 = vst [vmem:[#allocation2 + $0x60] sm:$0xff] %v246
    %386 = vst [vmem:[#allocation2 + $0x68] sm:$0xff] %v248
    %387 = vst [vmem:[#allocation2 + $0x70] sm:$0xff] %v355
    %388 = vst [vmem:[#allocation2 + $0x78] sm:$0xff] %v252
    %389 = vst [vmem:[#allocation2 + $0x80] sm:$0xff] %v254
    %390 = vst [vmem:[#allocation2 + $0x88] sm:$0xff] %v360
    %391 = vst [vmem:[#allocation2 + $0x90] sm:$0xff] %v258
    %392 = vst [vmem:[#allocation2 + $0x98] sm:$0xff] %v260
    %393 = vst [vmem:[#allocation2 + $0xa0] sm:$0xff] %v365
    %394 = vst [vmem:[#allocation2 + $0xa8] sm:$0xff] %v264
    %395 = vst [vmem:[#allocation2 + $0xb0] sm:$0xff] %v266
    %396 = vst [vmem:[#allocation2 + $0xb8] sm:$0xff] %v370
    %v397 = vld [vmem:[#allocation8] sm:$0xff]
    %v398 = vld [vmem:[#allocation8 + $0x8] sm:$0xff]
    %v399 = vld [vmem:[#allocation8 + $0x10] sm:$0xff]
    %v400 = vld [vmem:[#allocation8 + $0x18] sm:$0xff]
    %v401 = vld [vmem:[#allocation8 + $0x20] sm:$0xff]
    %v402 = vld [vmem:[#allocation8 + $0x28] sm:$0xff]
    %v403 = vld [vmem:[#allocation8 + $0x30] sm:$0xff]
    %v404 = vld [vmem:[#allocation8 + $0x38] sm:$0xff]
    %v405 = vld [vmem:[#allocation8 + $0x40] sm:$0xff]
    %v406 = vld [vmem:[#allocation8 + $0x48] sm:$0xff]
    %v407 = vld [vmem:[#allocation8 + $0x50] sm:$0xff]
    %v408 = vld [vmem:[#allocation8 + $0x58] sm:$0xff]
    %v409 = vld [vmem:[#allocation8 + $0x60] sm:$0xff]
    %v410 = vld [vmem:[#allocation8 + $0x68] sm:$0xff]
    %v411 = vld [vmem:[#allocation8 + $0x70] sm:$0xff]
    %v412 = vld [vmem:[#allocation8 + $0x78] sm:$0xff]
    %v413 = vld [vmem:[#allocation8 + $0x80] sm:$0xff]
    %v414 = vld [vmem:[#allocation8 + $0x88] sm:$0xff]
    %v415 = vld [vmem:[#allocation8 + $0x90] sm:$0xff]
    %v416 = vld [vmem:[#allocation8 + $0x98] sm:$0xff]
    %v417 = vld [vmem:[#allocation8 + $0xa0] sm:$0xff]
    %v418 = vld [vmem:[#allocation8 + $0xa8] sm:$0xff]
    %v419 = vld [vmem:[#allocation8 + $0xb0] sm:$0xff]
    %v420 = vld [vmem:[#allocation8 + $0xb8] sm:$0xff]
    %v421 = vld [vmem:[#allocation8 + $0xc0] sm:$0xff]
    %v422 = vld [vmem:[#allocation8 + $0xc8] sm:$0xff]
    %v423 = vld [vmem:[#allocation8 + $0xd0] sm:$0xff]
    %v424 = vld [vmem:[#allocation8 + $0xd8] sm:$0xff]
    %v425 = vld [vmem:[#allocation8 + $0xe0] sm:$0xff]
    %v426 = vld [vmem:[#allocation8 + $0xe8] sm:$0xff]
    %v427 = vld [vmem:[#allocation8 + $0xf0] sm:$0xff]
    %v428 = vld [vmem:[#allocation8 + $0xf8] sm:$0xff]
    %v429 = vld [vmem:[#allocation8 + $0x100] sm:$0xff]
    %v430 = vld [vmem:[#allocation8 + $0x108] sm:$0xff]
    %v431 = vld [vmem:[#allocation8 + $0x110] sm:$0xff]
    %v432 = vld [vmem:[#allocation8 + $0x118] sm:$0xff]
    %v433 = vld [vmem:[#allocation8 + $0x120] sm:$0xff]
    %v434 = vld [vmem:[#allocation8 + $0x128] sm:$0xff]
    %v435 = vld [vmem:[#allocation8 + $0x130] sm:$0xff]
    %v436 = vld [vmem:[#allocation8 + $0x138] sm:$0xff]
    %v437 = vld [vmem:[#allocation8 + $0x140] sm:$0xff]
    %v438 = vld [vmem:[#allocation8 + $0x148] sm:$0xff]
    %v439 = vld [vmem:[#allocation8 + $0x150] sm:$0xff]
    %v440 = vld [vmem:[#allocation8 + $0x158] sm:$0xff]
    %v441 = vld [vmem:[#allocation8 + $0x160] sm:$0xff]
    %v442 = vld [vmem:[#allocation8 + $0x168] sm:$0xff]
    %v443 = vld [vmem:[#allocation8 + $0x170] sm:$0xff]
    %v444 = vld [vmem:[#allocation8 + $0x178] sm:$0xff]
    %v445 = vld [vmem:[%s4] sm:$0x1]
    %v447 = vlaneseq
    %v448 = vshrl.u32 %v447, 7
    %v449 = vsub.s32 0, %v448
    %v450 = vrot.slane %v445, %v449
    %s452 = smul.u32 0, 3
    %s453 = smul.addr %s452, 8
    %s454 = scalar_lea.vmem [#allocation2], %s453
    %v455 = vld [vmem:[%s454] sm:$0xff]
    %v456 = vld [vmem:[%s454 + $0x8] sm:$0xff]
    %v457 = vld [vmem:[%s454 + $0x10] sm:$0xff]
    %458 = vmatprep.subr.mxu0 %v398
    %459 = vmatpush1.msra.mxu0 %v397
    %460 = vmatprep.subr.mxu0 %v401
    %461 = vmatpush1.msra.mxu0 %v400
    %462 = vmatprep.subr.mxu0 %v404
    %463 = vmatpush1.msra.mxu0 %v403
    %464 = vmatprep.subr.mxu0 %v407
    %465 = vmatpush1.msra.mxu0 %v406
    %466 = vmatprep.subr.mxu0 %v410
    %467 = vmatpush1.msra.mxu0 %v409
    %468 = vmatprep.subr.mxu0 %v413
    %469 = vmatpush1.msra.mxu0 %v412
    %470 = vmatprep.subr.mxu0 %v416
    %471 = vmatpush1.msra.mxu0 %v415
    %472 = vmatprep.subr.mxu0 %v419
    %473 = vmatpush1.msra.mxu0 %v418
    %474 = vmatprep.subr.mxu0 %v422
    %475 = vmatpush1.msra.mxu0 %v421
    %476 = vmatprep.subr.mxu0 %v425
    %477 = vmatpush1.msra.mxu0 %v424
    %478 = vmatprep.subr.mxu0 %v428
    %479 = vmatpush1.msra.mxu0 %v427
    %480 = vmatprep.subr.mxu0 %v431
    %481 = vmatpush1.msra.mxu0 %v430
    %482 = vmatprep.subr.mxu0 %v434
    %483 = vmatpush1.msra.mxu0 %v433
    %484 = vmatprep.subr.mxu0 %v437
    %485 = vmatpush1.msra.mxu0 %v436
    %486 = vmatprep.subr.mxu0 %v440
    %487 = vmatpush1.msra.mxu0 %v439
    %488 = vmatprep.subr.mxu0 %v443
    %489 = vmatpush1.msra.mxu0 %v442
    %490 = vmatprep.subr.mxu0 0.0
    %491 = vmatpush1.msra.mxu0 0.0
    %492 = vmatprep.subr.mxu0 0.0
    %493 = vmatpush1.msra.mxu0 0.0
    %494 = vmatprep.subr.mxu0 0.0
    %495 = vmatpush1.msra.mxu0 0.0
    %496 = vmatprep.subr.mxu0 0.0
    %497 = vmatpush1.msra.mxu0 0.0
    %498 = vmatprep.subr.mxu0 0.0
    %499 = vmatpush1.msra.mxu0 0.0
    %500 = vmatprep.subr.mxu0 0.0
    %501 = vmatpush1.msra.mxu0 0.0
    %502 = vmatprep.subr.mxu0 0.0
    %503 = vmatpush1.msra.mxu0 0.0
    %504 = vmatprep.subr.mxu0 0.0
    %505 = vmatpush1.msra.mxu0 0.0
    %506 = vmatprep.subr.mxu0 0.0
    %507 = vmatpush1.msra.mxu0 0.0
    %508 = vmatprep.subr.mxu0 0.0
    %509 = vmatpush1.msra.mxu0 0.0
    %510 = vmatprep.subr.mxu0 0.0
    %511 = vmatpush1.msra.mxu0 0.0
    %512 = vmatprep.subr.mxu0 0.0
    %513 = vmatpush1.msra.mxu0 0.0
    %514 = vmatprep.subr.mxu0 0.0
    %515 = vmatpush1.msra.mxu0 0.0
    %516 = vmatprep.subr.mxu0 0.0
    %517 = vmatpush1.msra.mxu0 0.0
    %518 = vmatprep.subr.mxu0 0.0
    %519 = vmatpush1.msra.mxu0 0.0
    %520 = vmatprep.subr.mxu0 0.0
    %521 = vmatpush1.msra.mxu0 0.0
    %522 = vmatprep.mubr.f32.mxu0 0.0
    %523 = vmatmul.mubr.f32.gmra.mrb[0].mxu0 0.0
    %v524 = vpop.f32.mrb[0].mxu0
    %v525 = vadd.f32 0.0, %v524
    %v526 = vpop.f32.mrb[0].mxu0
    %v527 = vadd.f32 0.0, %v526
    %528 = vdwg.mxu0
    %529 = vmatprep.subr.mxu0 0.0
    %530 = vmatpush1.msra.mxu0 %v399
    %531 = vmatprep.subr.mxu0 0.0
    %532 = vmatpush1.msra.mxu0 %v402
    %533 = vmatprep.subr.mxu0 0.0
    %534 = vmatpush1.msra.mxu0 %v405
    %535 = vmatprep.subr.mxu0 0.0
    %536 = vmatpush1.msra.mxu0 %v408
    %537 = vmatprep.subr.mxu0 0.0
    %538 = vmatpush1.msra.mxu0 %v411
    %539 = vmatprep.subr.mxu0 0.0
    %540 = vmatpush1.msra.mxu0 %v414
    %541 = vmatprep.subr.mxu0 0.0
    %542 = vmatpush1.msra.mxu0 %v417
    %543 = vmatprep.subr.mxu0 0.0
    %544 = vmatpush1.msra.mxu0 %v420
    %545 = vmatprep.subr.mxu0 0.0
    %546 = vmatpush1.msra.mxu0 %v423
    %547 = vmatprep.subr.mxu0 0.0
    %548 = vmatpush1.msra.mxu0 %v426
    %549 = vmatprep.subr.mxu0 0.0
    %550 = vmatpush1.msra.mxu0 %v429
    %551 = vmatprep.subr.mxu0 0.0
    %552 = vmatpush1.msra.mxu0 %v432
    %553 = vmatprep.subr.mxu0 0.0
    %554 = vmatpush1.msra.mxu0 %v435
    %555 = vmatprep.subr.mxu0 0.0
    %556 = vmatpush1.msra.mxu0 %v438
    %557 = vmatprep.subr.mxu0 0.0
    %558 = vmatpush1.msra.mxu0 %v441
    %559 = vmatprep.subr.mxu0 0.0
    %560 = vmatpush1.msra.mxu0 %v444
    %561 = vmatprep.subr.mxu0 0.0
    %562 = vmatpush1.msra.mxu0 0.0
    %563 = vmatprep.subr.mxu0 0.0
    %564 = vmatpush1.msra.mxu0 0.0
    %565 = vmatprep.subr.mxu0 0.0
    %566 = vmatpush1.msra.mxu0 0.0
    %567 = vmatprep.subr.mxu0 0.0
    %568 = vmatpush1.msra.mxu0 0.0
    %569 = vmatprep.subr.mxu0 0.0
    %570 = vmatpush1.msra.mxu0 0.0
    %571 = vmatprep.subr.mxu0 0.0
    %572 = vmatpush1.msra.mxu0 0.0
    %573 = vmatprep.subr.mxu0 0.0
    %574 = vmatpush1.msra.mxu0 0.0
    %575 = vmatprep.subr.mxu0 0.0
    %576 = vmatpush1.msra.mxu0 0.0
    %577 = vmatprep.subr.mxu0 0.0
    %578 = vmatpush1.msra.mxu0 0.0
    %579 = vmatprep.subr.mxu0 0.0
    %580 = vmatpush1.msra.mxu0 0.0
    %581 = vmatprep.subr.mxu0 0.0
    %582 = vmatpush1.msra.mxu0 0.0
    %583 = vmatprep.subr.mxu0 0.0
    %584 = vmatpush1.msra.mxu0 0.0
    %585 = vmatprep.subr.mxu0 0.0
    %586 = vmatpush1.msra.mxu0 0.0
    %587 = vmatprep.subr.mxu0 0.0
    %588 = vmatpush1.msra.mxu0 0.0
    %589 = vmatprep.subr.mxu0 0.0
    %590 = vmatpush1.msra.mxu0 0.0
    %591 = vmatprep.subr.mxu0 0.0
    %592 = vmatpush1.msra.mxu0 0.0
    %593 = vmatprep.mubr.f32.mxu0 0.0
    %594 = vmatmul.mubr.f32.gmra.mrb[0].mxu0 0.0
    %v595 = vpop.f32.mrb[0].mxu0
    %v596 = vadd.f32 0.0, %v595
    %v597 = vpop.f32.mrb[0].mxu0
    %598 = vdwg.mxu0
    %v599 = vadd.f32 %v455, %v525
    %v600 = vxor.u32 %v599, 2147483648
    %v601 = vmul.f32 %v600, 1.442695
    %v602 = vpow.pop %v601
    %v603 = vadd.f32 %v602, 1.0
    %v604 = vrcp.pop %v603
    %v605 = vmul.f32 1.0, %v604
    %v606 = vadd.f32 %v456, %v527
    %v607 = vxor.u32 %v606, 2147483648
    %v608 = vmul.f32 %v607, 1.442695
    %v609 = vpow.pop %v608
    %v610 = vadd.f32 %v609, 1.0
    %v611 = vrcp.pop %v610
    %v612 = vmul.f32 1.0, %v611
    %v613 = vadd.f32 %v596, %v450
    %v614 = vmul.f32 %v605, %v613
    %v615 = vadd.f32 %v457, %v614
    %v616 = vtanh.pop %v615
    %v617 = vsub.f32 1.0, %v612
    %v618 = vmul.f32 %v617, %v616
    %v619 = vmul.f32 %v612, 0.0
    %v620 = vadd.f32 %v618, %v619
    %s621 = smul.u32 1, 3
    %s622 = smul.addr %s621, 8
    %s623 = scalar_lea.vmem [#allocation2], %s622
    %v624 = vld [vmem:[%s623] sm:$0xff]
    %v625 = vld [vmem:[%s623 + $0x8] sm:$0xff]
    %v626 = vld [vmem:[%s623 + $0x10] sm:$0xff]
    %627 = vmatprep.subr.mxu0 %v398
    %628 = vmatpush1.msra.mxu0 %v397
    %629 = vmatprep.subr.mxu0 %v401
    %630 = vmatpush1.msra.mxu0 %v400
    %631 = vmatprep.subr.mxu0 %v404
    %632 = vmatpush1.msra.mxu0 %v403
    %633 = vmatprep.subr.mxu0 %v407
    %634 = vmatpush1.msra.mxu0 %v406
    %635 = vmatprep.subr.mxu0 %v410
    %636 = vmatpush1.msra.mxu0 %v409
    %637 = vmatprep.subr.mxu0 %v413
    %638 = vmatpush1.msra.mxu0 %v412
    %639 = vmatprep.subr.mxu0 %v416
    %640 = vmatpush1.msra.mxu0 %v415
    %641 = vmatprep.subr.mxu0 %v419
    %642 = vmatpush1.msra.mxu0 %v418
    %643 = vmatprep.subr.mxu0 %v422
    %644 = vmatpush1.msra.mxu0 %v421
    %645 = vmatprep.subr.mxu0 %v425
    %646 = vmatpush1.msra.mxu0 %v424
    %647 = vmatprep.subr.mxu0 %v428
    %648 = vmatpush1.msra.mxu0 %v427
    %649 = vmatprep.subr.mxu0 %v431
    %650 = vmatpush1.msra.mxu0 %v430
    %651 = vmatprep.subr.mxu0 %v434
    %652 = vmatpush1.msra.mxu0 %v433
    %653 = vmatprep.subr.mxu0 %v437
    %654 = vmatpush1.msra.mxu0 %v436
    %655 = vmatprep.subr.mxu0 %v440
    %656 = vmatpush1.msra.mxu0 %v439
    %657 = vmatprep.subr.mxu0 %v443
    %658 = vmatpush1.msra.mxu0 %v442
    %659 = vmatprep.subr.mxu0 0.0
    %660 = vmatpush1.msra.mxu0 0.0
    %661 = vmatprep.subr.mxu0 0.0
    %662 = vmatpush1.msra.mxu0 0.0
    %663 = vmatprep.subr.mxu0 0.0
    %664 = vmatpush1.msra.mxu0 0.0
    %665 = vmatprep.subr.mxu0 0.0
    %666 = vmatpush1.msra.mxu0 0.0
    %667 = vmatprep.subr.mxu0 0.0
    %668 = vmatpush1.msra.mxu0 0.0
    %669 = vmatprep.subr.mxu0 0.0
    %670 = vmatpush1.msra.mxu0 0.0
    %671 = vmatprep.subr.mxu0 0.0
    %672 = vmatpush1.msra.mxu0 0.0
    %673 = vmatprep.subr.mxu0 0.0
    %674 = vmatpush1.msra.mxu0 0.0
    %675 = vmatprep.subr.mxu0 0.0
    %676 = vmatpush1.msra.mxu0 0.0
    %677 = vmatprep.subr.mxu0 0.0
    %678 = vmatpush1.msra.mxu0 0.0
    %679 = vmatprep.subr.mxu0 0.0
    %680 = vmatpush1.msra.mxu0 0.0
    %681 = vmatprep.subr.mxu0 0.0
    %682 = vmatpush1.msra.mxu0 0.0
    %683 = vmatprep.subr.mxu0 0.0
    %684 = vmatpush1.msra.mxu0 0.0
    %685 = vmatprep.subr.mxu0 0.0
    %686 = vmatpush1.msra.mxu0 0.0
    %687 = vmatprep.subr.mxu0 0.0
    %688 = vmatpush1.msra.mxu0 0.0
    %689 = vmatprep.subr.mxu0 0.0
    %690 = vmatpush1.msra.mxu0 0.0
    %691 = vmatprep.mubr.f32.mxu0 0.0
    %692 = vmatmul.mubr.f32.gmra.mrb[0].mxu0 %v620
    %v693 = vpop.f32.mrb[0].mxu0
    %v694 = vadd.f32 0.0, %v693
    %v695 = vpop.f32.mrb[0].mxu0
    %v696 = vadd.f32 0.0, %v695
    %697 = vdwg.mxu0
    %698 = vmatprep.subr.mxu0 0.0
    %699 = vmatpush1.msra.mxu0 %v399
    %700 = vmatprep.subr.mxu0 0.0
    %701 = vmatpush1.msra.mxu0 %v402
    %702 = vmatprep.subr.mxu0 0.0
    %703 = vmatpush1.msra.mxu0 %v405
    %704 = vmatprep.subr.mxu0 0.0
    %705 = vmatpush1.msra.mxu0 %v408
    %706 = vmatprep.subr.mxu0 0.0
    %707 = vmatpush1.msra.mxu0 %v411
    %708 = vmatprep.subr.mxu0 0.0
    %709 = vmatpush1.msra.mxu0 %v414
    %710 = vmatprep.subr.mxu0 0.0
    %711 = vmatpush1.msra.mxu0 %v417
    %712 = vmatprep.subr.mxu0 0.0
    %713 = vmatpush1.msra.mxu0 %v420
    %714 = vmatprep.subr.mxu0 0.0
    %715 = vmatpush1.msra.mxu0 %v423
    %716 = vmatprep.subr.mxu0 0.0
    %717 = vmatpush1.msra.mxu0 %v426
    %718 = vmatprep.subr.mxu0 0.0
    %719 = vmatpush1.msra.mxu0 %v429
    %720 = vmatprep.subr.mxu0 0.0
    %721 = vmatpush1.msra.mxu0 %v432
    %722 = vmatprep.subr.mxu0 0.0
    %723 = vmatpush1.msra.mxu0 %v435
    %724 = vmatprep.subr.mxu0 0.0
    %725 = vmatpush1.msra.mxu0 %v438
    %726 = vmatprep.subr.mxu0 0.0
    %727 = vmatpush1.msra.mxu0 %v441
    %728 = vmatprep.subr.mxu0 0.0
    %729 = vmatpush1.msra.mxu0 %v444
    %730 = vmatprep.subr.mxu0 0.0
    %731 = vmatpush1.msra.mxu0 0.0
    %732 = vmatprep.subr.mxu0 0.0
    %733 = vmatpush1.msra.mxu0 0.0
    %734 = vmatprep.subr.mxu0 0.0
    %735 = vmatpush1.msra.mxu0 0.0
    %736 = vmatprep.subr.mxu0 0.0
    %737 = vmatpush1.msra.mxu0 0.0
    %738 = vmatprep.subr.mxu0 0.0
    %739 = vmatpush1.msra.mxu0 0.0
    %740 = vmatprep.subr.mxu0 0.0
    %741 = vmatpush1.msra.mxu0 0.0
    %742 = vmatprep.subr.mxu0 0.0
    %743 = vmatpush1.msra.mxu0 0.0
    %744 = vmatprep.subr.mxu0 0.0
    %745 = vmatpush1.msra.mxu0 0.0
    %746 = vmatprep.subr.mxu0 0.0
    %747 = vmatpush1.msra.mxu0 0.0
    %748 = vmatprep.subr.mxu0 0.0
    %749 = vmatpush1.msra.mxu0 0.0
    %750 = vmatprep.subr.mxu0 0.0
    %751 = vmatpush1.msra.mxu0 0.0
    %752 = vmatprep.subr.mxu0 0.0
    %753 = vmatpush1.msra.mxu0 0.0
    %754 = vmatprep.subr.mxu0 0.0
    %755 = vmatpush1.msra.mxu0 0.0
    %756 = vmatprep.subr.mxu0 0.0
    %757 = vmatpush1.msra.mxu0 0.0
    %758 = vmatprep.subr.mxu0 0.0
    %759 = vmatpush1.msra.mxu0 0.0
    %760 = vmatprep.subr.mxu0 0.0
    %761 = vmatpush1.msra.mxu0 0.0
    %762 = vmatprep.mubr.f32.mxu0 0.0
    %763 = vmatmul.mubr.f32.gmra.mrb[0].mxu0 %v620
    %v764 = vpop.f32.mrb[0].mxu0
    %v765 = vadd.f32 0.0, %v764
    %v766 = vpop.f32.mrb[0].mxu0
    %767 = vdwg.mxu0
    %v768 = vadd.f32 %v624, %v694
    %v769 = vxor.u32 %v768, 2147483648
    %v770 = vmul.f32 %v769, 1.442695
    %v771 = vpow.pop %v770
    %v772 = vadd.f32 %v771, 1.0
    %v773 = vrcp.pop %v772
    %v774 = vmul.f32 1.0, %v773
    %v775 = vadd.f32 %v625, %v696
    %v776 = vxor.u32 %v775, 2147483648
    %v777 = vmul.f32 %v776, 1.442695
    %v778 = vpow.pop %v777
    %v779 = vadd.f32 %v778, 1.0
    %v780 = vrcp.pop %v779
    %v781 = vmul.f32 1.0, %v780
    %v782 = vadd.f32 %v765, %v450
    %v783 = vmul.f32 %v774, %v782
    %v784 = vadd.f32 %v626, %v783
    %v785 = vtanh.pop %v784
    %v786 = vsub.f32 1.0, %v781
    %v787 = vmul.f32 %v786, %v785
    %v788 = vmul.f32 %v781, %v620
    %v789 = vadd.f32 %v787, %v788
    %s790 = smul.u32 2, 3
    %s791 = smul.addr %s790, 8
    %s792 = scalar_lea.vmem [#allocation2], %s791
    %v793 = vld [vmem:[%s792] sm:$0xff]
    %v794 = vld [vmem:[%s792 + $0x8] sm:$0xff]
    %v795 = vld [vmem:[%s792 + $0x10] sm:$0xff]
    %796 = vmatprep.subr.mxu0 %v398
    %797 = vmatpush1.msra.mxu0 %v397
    %798 = vmatprep.subr.mxu0 %v401
    %799 = vmatpush1.msra.mxu0 %v400
    %800 = vmatprep.subr.mxu0 %v404
    %801 = vmatpush1.msra.mxu0 %v403
    %802 = vmatprep.subr.mxu0 %v407
    %803 = vmatpush1.msra.mxu0 %v406
    %804 = vmatprep.subr.mxu0 %v410
    %805 = vmatpush1.msra.mxu0 %v409
    %806 = vmatprep.subr.mxu0 %v413
    %807 = vmatpush1.msra.mxu0 %v412
    %808 = vmatprep.subr.mxu0 %v416
    %809 = vmatpush1.msra.mxu0 %v415
    %810 = vmatprep.subr.mxu0 %v419
    %811 = vmatpush1.msra.mxu0 %v418
    %812 = vmatprep.subr.mxu0 %v422
    %813 = vmatpush1.msra.mxu0 %v421
    %814 = vmatprep.subr.mxu0 %v425
    %815 = vmatpush1.msra.mxu0 %v424
    %816 = vmatprep.subr.mxu0 %v428
    %817 = vmatpush1.msra.mxu0 %v427
    %818 = vmatprep.subr.mxu0 %v431
    %819 = vmatpush1.msra.mxu0 %v430
    %820 = vmatprep.subr.mxu0 %v434
    %821 = vmatpush1.msra.mxu0 %v433
    %822 = vmatprep.subr.mxu0 %v437
    %823 = vmatpush1.msra.mxu0 %v436
    %824 = vmatprep.subr.mxu0 %v440
    %825 = vmatpush1.msra.mxu0 %v439
    %826 = vmatprep.subr.mxu0 %v443
    %827 = vmatpush1.msra.mxu0 %v442
    %828 = vmatprep.subr.mxu0 0.0
    %829 = vmatpush1.msra.mxu0 0.0
    %830 = vmatprep.subr.mxu0 0.0
    %831 = vmatpush1.msra.mxu0 0.0
    %832 = vmatprep.subr.mxu0 0.0
    %833 = vmatpush1.msra.mxu0 0.0
    %834 = vmatprep.subr.mxu0 0.0
    %835 = vmatpush1.msra.mxu0 0.0
    %836 = vmatprep.subr.mxu0 0.0
    %837 = vmatpush1.msra.mxu0 0.0
    %838 = vmatprep.subr.mxu0 0.0
    %839 = vmatpush1.msra.mxu0 0.0
    %840 = vmatprep.subr.mxu0 0.0
    %841 = vmatpush1.msra.mxu0 0.0
    %842 = vmatprep.subr.mxu0 0.0
    %843 = vmatpush1.msra.mxu0 0.0
    %844 = vmatprep.subr.mxu0 0.0
    %845 = vmatpush1.msra.mxu0 0.0
    %846 = vmatprep.subr.mxu0 0.0
    %847 = vmatpush1.msra.mxu0 0.0
    %848 = vmatprep.subr.mxu0 0.0
    %849 = vmatpush1.msra.mxu0 0.0
    %850 = vmatprep.subr.mxu0 0.0
    %851 = vmatpush1.msra.mxu0 0.0
    %852 = vmatprep.subr.mxu0 0.0
    %853 = vmatpush1.msra.mxu0 0.0
    %854 = vmatprep.subr.mxu0 0.0
    %855 = vmatpush1.msra.mxu0 0.0
    %856 = vmatprep.subr.mxu0 0.0
    %857 = vmatpush1.msra.mxu0 0.0
    %858 = vmatprep.subr.mxu0 0.0
    %859 = vmatpush1.msra.mxu0 0.0
    %860 = vmatprep.mubr.f32.mxu0 0.0
    %861 = vmatmul.mubr.f32.gmra.mrb[0].mxu0 %v789
    %v862 = vpop.f32.mrb[0].mxu0
    %v863 = vadd.f32 0.0, %v862
    %v864 = vpop.f32.mrb[0].mxu0
    %v865 = vadd.f32 0.0, %v864
    %866 = vdwg.mxu0
    %867 = vmatprep.subr.mxu0 0.0
    %868 = vmatpush1.msra.mxu0 %v399
    %869 = vmatprep.subr.mxu0 0.0
    %870 = vmatpush1.msra.mxu0 %v402
    %871 = vmatprep.subr.mxu0 0.0
    %872 = vmatpush1.msra.mxu0 %v405
    %873 = vmatprep.subr.mxu0 0.0
    %874 = vmatpush1.msra.mxu0 %v408
    %875 = vmatprep.subr.mxu0 0.0
    %876 = vmatpush1.msra.mxu0 %v411
    %877 = vmatprep.subr.mxu0 0.0
    %878 = vmatpush1.msra.mxu0 %v414
    %879 = vmatprep.subr.mxu0 0.0
    %880 = vmatpush1.msra.mxu0 %v417
    %881 = vmatprep.subr.mxu0 0.0
    %882 = vmatpush1.msra.mxu0 %v420
    %883 = vmatprep.subr.mxu0 0.0
    %884 = vmatpush1.msra.mxu0 %v423
    %885 = vmatprep.subr.mxu0 0.0
    %886 = vmatpush1.msra.mxu0 %v426
    %887 = vmatprep.subr.mxu0 0.0
    %888 = vmatpush1.msra.mxu0 %v429
    %889 = vmatprep.subr.mxu0 0.0
    %890 = vmatpush1.msra.mxu0 %v432
    %891 = vmatprep.subr.mxu0 0.0
    %892 = vmatpush1.msra.mxu0 %v435
    %893 = vmatprep.subr.mxu0 0.0
    %894 = vmatpush1.msra.mxu0 %v438
    %895 = vmatprep.subr.mxu0 0.0
    %896 = vmatpush1.msra.mxu0 %v441
    %897 = vmatprep.subr.mxu0 0.0
    %898 = vmatpush1.msra.mxu0 %v444
    %899 = vmatprep.subr.mxu0 0.0
    %900 = vmatpush1.msra.mxu0 0.0
    %901 = vmatprep.subr.mxu0 0.0
    %902 = vmatpush1.msra.mxu0 0.0
    %903 = vmatprep.subr.mxu0 0.0
    %904 = vmatpush1.msra.mxu0 0.0
    %905 = vmatprep.subr.mxu0 0.0
    %906 = vmatpush1.msra.mxu0 0.0
    %907 = vmatprep.subr.mxu0 0.0
    %908 = vmatpush1.msra.mxu0 0.0
    %909 = vmatprep.subr.mxu0 0.0
    %910 = vmatpush1.msra.mxu0 0.0
    %911 = vmatprep.subr.mxu0 0.0
    %912 = vmatpush1.msra.mxu0 0.0
    %913 = vmatprep.subr.mxu0 0.0
    %914 = vmatpush1.msra.mxu0 0.0
    %915 = vmatprep.subr.mxu0 0.0
    %916 = vmatpush1.msra.mxu0 0.0
    %917 = vmatprep.subr.mxu0 0.0
    %918 = vmatpush1.msra.mxu0 0.0
    %919 = vmatprep.subr.mxu0 0.0
    %920 = vmatpush1.msra.mxu0 0.0
    %921 = vmatprep.subr.mxu0 0.0
    %922 = vmatpush1.msra.mxu0 0.0
    %923 = vmatprep.subr.mxu0 0.0
    %924 = vmatpush1.msra.mxu0 0.0
    %925 = vmatprep.subr.mxu0 0.0
    %926 = vmatpush1.msra.mxu0 0.0
    %927 = vmatprep.subr.mxu0 0.0
    %928 = vmatpush1.msra.mxu0 0.0
    %929 = vmatprep.subr.mxu0 0.0
    %930 = vmatpush1.msra.mxu0 0.0
    %931 = vmatprep.mubr.f32.mxu0 0.0
    %932 = vmatmul.mubr.f32.gmra.mrb[0].mxu0 %v789
    %v933 = vpop.f32.mrb[0].mxu0
    %v934 = vadd.f32 0.0, %v933
    %v935 = vpop.f32.mrb[0].mxu0
    %936 = vdwg.mxu0
    %v937 = vadd.f32 %v793, %v863
    %v938 = vxor.u32 %v937, 2147483648
    %v939 = vmul.f32 %v938, 1.442695
    %v940 = vpow.pop %v939
    %v941 = vadd.f32 %v940, 1.0
    %v942 = vrcp.pop %v941
    %v943 = vmul.f32 1.0, %v942
    %v944 = vadd.f32 %v794, %v865
    %v945 = vxor.u32 %v944, 2147483648
    %v946 = vmul.f32 %v945, 1.442695
    %v947 = vpow.pop %v946
    %v948 = vadd.f32 %v947, 1.0
    %v949 = vrcp.pop %v948
    %v950 = vmul.f32 1.0, %v949
    %v951 = vadd.f32 %v934, %v450
    %v952 = vmul.f32 %v943, %v951
    %v953 = vadd.f32 %v795, %v952
    %v954 = vtanh.pop %v953
    %v955 = vsub.f32 1.0, %v950
    %v956 = vmul.f32 %v955, %v954
    %v957 = vmul.f32 %v950, %v789
    %v958 = vadd.f32 %v956, %v957
    %s959 = smul.u32 3, 3
    %s960 = smul.addr %s959, 8
    %s961 = scalar_lea.vmem [#allocation2], %s960
    %v962 = vld [vmem:[%s961] sm:$0xff]
    %v963 = vld [vmem:[%s961 + $0x8] sm:$0xff]
    %v964 = vld [vmem:[%s961 + $0x10] sm:$0xff]
    %965 = vmatprep.subr.mxu0 %v398
    %966 = vmatpush1.msra.mxu0 %v397
    %967 = vmatprep.subr.mxu0 %v401
    %968 = vmatpush1.msra.mxu0 %v400
    %969 = vmatprep.subr.mxu0 %v404
    %970 = vmatpush1.msra.mxu0 %v403
    %971 = vmatprep.subr.mxu0 %v407
    %972 = vmatpush1.msra.mxu0 %v406
    %973 = vmatprep.subr.mxu0 %v410
    %974 = vmatpush1.msra.mxu0 %v409
    %975 = vmatprep.subr.mxu0 %v413
    %976 = vmatpush1.msra.mxu0 %v412
    %977 = vmatprep.subr.mxu0 %v416
    %978 = vmatpush1.msra.mxu0 %v415
    %979 = vmatprep.subr.mxu0 %v419
    %980 = vmatpush1.msra.mxu0 %v418
    %981 = vmatprep.subr.mxu0 %v422
    %982 = vmatpush1.msra.mxu0 %v421
    %983 = vmatprep.subr.mxu0 %v425
    %984 = vmatpush1.msra.mxu0 %v424
    %985 = vmatprep.subr.mxu0 %v428
    %986 = vmatpush1.msra.mxu0 %v427
    %987 = vmatprep.subr.mxu0 %v431
    %988 = vmatpush1.msra.mxu0 %v430
    %989 = vmatprep.subr.mxu0 %v434
    %990 = vmatpush1.msra.mxu0 %v433
    %991 = vmatprep.subr.mxu0 %v437
    %992 = vmatpush1.msra.mxu0 %v436
    %993 = vmatprep.subr.mxu0 %v440
    %994 = vmatpush1.msra.mxu0 %v439
    %995 = vmatprep.subr.mxu0 %v443
    %996 = vmatpush1.msra.mxu0 %v442
    %997 = vmatprep.subr.mxu0 0.0
    %998 = vmatpush1.msra.mxu0 0.0
    %999 = vmatprep.subr.mxu0 0.0
    %1000 = vmatpush1.msra.mxu0 0.0
    %1001 = vmatprep.subr.mxu0 0.0
    %1002 = vmatpush1.msra.mxu0 0.0
    %1003 = vmatprep.subr.mxu0 0.0
    %1004 = vmatpush1.msra.mxu0 0.0
    %1005 = vmatprep.subr.mxu0 0.0
    %1006 = vmatpush1.msra.mxu0 0.0
    %1007 = vmatprep.subr.mxu0 0.0
    %1008 = vmatpush1.msra.mxu0 0.0
    %1009 = vmatprep.subr.mxu0 0.0
    %1010 = vmatpush1.msra.mxu0 0.0
    %1011 = vmatprep.subr.mxu0 0.0
    %1012 = vmatpush1.msra.mxu0 0.0
    %1013 = vmatprep.subr.mxu0 0.0
    %1014 = vmatpush1.msra.mxu0 0.0
    %1015 = vmatprep.subr.mxu0 0.0
    %1016 = vmatpush1.msra.mxu0 0.0
    %1017 = vmatprep.subr.mxu0 0.0
    %1018 = vmatpush1.msra.mxu0 0.0
    %1019 = vmatprep.subr.mxu0 0.0
    %1020 = vmatpush1.msra.mxu0 0.0
    %1021 = vmatprep.subr.mxu0 0.0
    %1022 = vmatpush1.msra.mxu0 0.0
    %1023 = vmatprep.subr.mxu0 0.0
    %1024 = vmatpush1.msra.mxu0 0.0
    %1025 = vmatprep.subr.mxu0 0.0
    %1026 = vmatpush1.msra.mxu0 0.0
    %1027 = vmatprep.subr.mxu0 0.0
    %1028 = vmatpush1.msra.mxu0 0.0
    %1029 = vmatprep.mubr.f32.mxu0 0.0
    %1030 = vmatmul.mubr.f32.gmra.mrb[0].mxu0 %v958
    %v1031 = vpop.f32.mrb[0].mxu0
    %v1032 = vadd.f32 0.0, %v1031
    %v1033 = vpop.f32.mrb[0].mxu0
    %v1034 = vadd.f32 0.0, %v1033
    %1035 = vdwg.mxu0
    %1036 = vmatprep.subr.mxu0 0.0
    %1037 = vmatpush1.msra.mxu0 %v399
    %1038 = vmatprep.subr.mxu0 0.0
    %1039 = vmatpush1.msra.mxu0 %v402
    %1040 = vmatprep.subr.mxu0 0.0
    %1041 = vmatpush1.msra.mxu0 %v405
    %1042 = vmatprep.subr.mxu0 0.0
    %1043 = vmatpush1.msra.mxu0 %v408
    %1044 = vmatprep.subr.mxu0 0.0
    %1045 = vmatpush1.msra.mxu0 %v411
    %1046 = vmatprep.subr.mxu0 0.0
    %1047 = vmatpush1.msra.mxu0 %v414
    %1048 = vmatprep.subr.mxu0 0.0
    %1049 = vmatpush1.msra.mxu0 %v417
    %1050 = vmatprep.subr.mxu0 0.0
    %1051 = vmatpush1.msra.mxu0 %v420
    %1052 = vmatprep.subr.mxu0 0.0
    %1053 = vmatpush1.msra.mxu0 %v423
    %1054 = vmatprep.subr.mxu0 0.0
    %1055 = vmatpush1.msra.mxu0 %v426
    %1056 = vmatprep.subr.mxu0 0.0
    %1057 = vmatpush1.msra.mxu0 %v429
    %1058 = vmatprep.subr.mxu0 0.0
    %1059 = vmatpush1.msra.mxu0 %v432
    %1060 = vmatprep.subr.mxu0 0.0
    %1061 = vmatpush1.msra.mxu0 %v435
    %1062 = vmatprep.subr.mxu0 0.0
    %1063 = vmatpush1.msra.mxu0 %v438
    %1064 = vmatprep.subr.mxu0 0.0
    %1065 = vmatpush1.msra.mxu0 %v441
    %1066 = vmatprep.subr.mxu0 0.0
    %1067 = vmatpush1.msra.mxu0 %v444
    %1068 = vmatprep.subr.mxu0 0.0
    %1069 = vmatpush1.msra.mxu0 0.0
    %1070 = vmatprep.subr.mxu0 0.0
    %1071 = vmatpush1.msra.mxu0 0.0
    %1072 = vmatprep.subr.mxu0 0.0
    %1073 = vmatpush1.msra.mxu0 0.0
    %1074 = vmatprep.subr.mxu0 0.0
    %1075 = vmatpush1.msra.mxu0 0.0
    %1076 = vmatprep.subr.mxu0 0.0
    %1077 = vmatpush1.msra.mxu0 0.0
    %1078 = vmatprep.subr.mxu0 0.0
    %1079 = vmatpush1.msra.mxu0 0.0
    %1080 = vmatprep.subr.mxu0 0.0
    %1081 = vmatpush1.msra.mxu0 0.0
    %1082 = vmatprep.subr.mxu0 0.0
    %1083 = vmatpush1.msra.mxu0 0.0
    %1084 = vmatprep.subr.mxu0 0.0
    %1085 = vmatpush1.msra.mxu0 0.0
    %1086 = vmatprep.subr.mxu0 0.0
    %1087 = vmatpush1.msra.mxu0 0.0
    %1088 = vmatprep.subr.mxu0 0.0
    %1089 = vmatpush1.msra.mxu0 0.0
    %1090 = vmatprep.subr.mxu0 0.0
    %1091 = vmatpush1.msra.mxu0 0.0
    %1092 = vmatprep.subr.mxu0 0.0
    %1093 = vmatpush1.msra.mxu0 0.0
    %1094 = vmatprep.subr.mxu0 0.0
    %1095 = vmatpush1.msra.mxu0 0.0
    %1096 = vmatprep.subr.mxu0 0.0
    %1097 = vmatpush1.msra.mxu0 0.0
    %1098 = vmatprep.subr.mxu0 0.0
    %1099 = vmatpush1.msra.mxu0 0.0
    %1100 = vmatprep.mubr.f32.mxu0 0.0
    %1101 = vmatmul.mubr.f32.gmra.mrb[0].mxu0 %v958
    %v1102 = vpop.f32.mrb[0].mxu0
    %v1103 = vadd.f32 0.0, %v1102
    %v1104 = vpop.f32.mrb[0].mxu0
    %1105 = vdwg.mxu0
    %v1106 = vadd.f32 %v962, %v1032
    %v1107 = vxor.u32 %v1106, 2147483648
    %v1108 = vmul.f32 %v1107, 1.442695
    %v1109 = vpow.pop %v1108
    %v1110 = vadd.f32 %v1109, 1.0
    %v1111 = vrcp.pop %v1110
    %v1112 = vmul.f32 1.0, %v1111
    %v1113 = vadd.f32 %v963, %v1034
    %v1114 = vxor.u32 %v1113, 2147483648
    %v1115 = vmul.f32 %v1114, 1.442695
    %v1116 = vpow.pop %v1115
    %v1117 = vadd.f32 %v1116, 1.0
    %v1118 = vrcp.pop %v1117
    %v1119 = vmul.f32 1.0, %v1118
    %v1120 = vadd.f32 %v1103, %v450
    %v1121 = vmul.f32 %v1112, %v1120
    %v1122 = vadd.f32 %v964, %v1121
    %v1123 = vtanh.pop %v1122
    %v1124 = vsub.f32 1.0, %v1119
    %v1125 = vmul.f32 %v1124, %v1123
    %v1126 = vmul.f32 %v1119, %v958
    %v1127 = vadd.f32 %v1125, %v1126
    %s1128 = smul.u32 4, 3
    %s1129 = smul.addr %s1128, 8
    %s1130 = scalar_lea.vmem [#allocation2], %s1129
    %v1131 = vld [vmem:[%s1130] sm:$0xff]
    %v1132 = vld [vmem:[%s1130 + $0x8] sm:$0xff]
    %v1133 = vld [vmem:[%s1130 + $0x10] sm:$0xff]
    %1134 = vmatprep.subr.mxu0 %v398
    %1135 = vmatpush1.msra.mxu0 %v397
    %1136 = vmatprep.subr.mxu0 %v401
    %1137 = vmatpush1.msra.mxu0 %v400
    %1138 = vmatprep.subr.mxu0 %v404
    %1139 = vmatpush1.msra.mxu0 %v403
    %1140 = vmatprep.subr.mxu0 %v407
    %1141 = vmatpush1.msra.mxu0 %v406
    %1142 = vmatprep.subr.mxu0 %v410
    %1143 = vmatpush1.msra.mxu0 %v409
    %1144 = vmatprep.subr.mxu0 %v413
    %1145 = vmatpush1.msra.mxu0 %v412
    %1146 = vmatprep.subr.mxu0 %v416
    %1147 = vmatpush1.msra.mxu0 %v415
    %1148 = vmatprep.subr.mxu0 %v419
    %1149 = vmatpush1.msra.mxu0 %v418
    %1150 = vmatprep.subr.mxu0 %v422
    %1151 = vmatpush1.msra.mxu0 %v421
    %1152 = vmatprep.subr.mxu0 %v425
    %1153 = vmatpush1.msra.mxu0 %v424
    %1154 = vmatprep.subr.mxu0 %v428
    %1155 = vmatpush1.msra.mxu0 %v427
    %1156 = vmatprep.subr.mxu0 %v431
    %1157 = vmatpush1.msra.mxu0 %v430
    %1158 = vmatprep.subr.mxu0 %v434
    %1159 = vmatpush1.msra.mxu0 %v433
    %1160 = vmatprep.subr.mxu0 %v437
    %1161 = vmatpush1.msra.mxu0 %v436
    %1162 = vmatprep.subr.mxu0 %v440
    %1163 = vmatpush1.msra.mxu0 %v439
    %1164 = vmatprep.subr.mxu0 %v443
    %1165 = vmatpush1.msra.mxu0 %v442
    %1166 = vmatprep.subr.mxu0 0.0
    %1167 = vmatpush1.msra.mxu0 0.0
    %1168 = vmatprep.subr.mxu0 0.0
    %1169 = vmatpush1.msra.mxu0 0.0
    %1170 = vmatprep.subr.mxu0 0.0
    %1171 = vmatpush1.msra.mxu0 0.0
    %1172 = vmatprep.subr.mxu0 0.0
    %1173 = vmatpush1.msra.mxu0 0.0
    %1174 = vmatprep.subr.mxu0 0.0
    %1175 = vmatpush1.msra.mxu0 0.0
    %1176 = vmatprep.subr.mxu0 0.0
    %1177 = vmatpush1.msra.mxu0 0.0
    %1178 = vmatprep.subr.mxu0 0.0
    %1179 = vmatpush1.msra.mxu0 0.0
    %1180 = vmatprep.subr.mxu0 0.0
    %1181 = vmatpush1.msra.mxu0 0.0
    %1182 = vmatprep.subr.mxu0 0.0
    %1183 = vmatpush1.msra.mxu0 0.0
    %1184 = vmatprep.subr.mxu0 0.0
    %1185 = vmatpush1.msra.mxu0 0.0
    %1186 = vmatprep.subr.mxu0 0.0
    %1187 = vmatpush1.msra.mxu0 0.0
    %1188 = vmatprep.subr.mxu0 0.0
    %1189 = vmatpush1.msra.mxu0 0.0
    %1190 = vmatprep.subr.mxu0 0.0
    %1191 = vmatpush1.msra.mxu0 0.0
    %1192 = vmatprep.subr.mxu0 0.0
    %1193 = vmatpush1.msra.mxu0 0.0
    %1194 = vmatprep.subr.mxu0 0.0
    %1195 = vmatpush1.msra.mxu0 0.0
    %1196 = vmatprep.subr.mxu0 0.0
    %1197 = vmatpush1.msra.mxu0 0.0
    %1198 = vmatprep.mubr.f32.mxu0 0.0
    %1199 = vmatmul.mubr.f32.gmra.mrb[0].mxu0 %v1127
    %v1200 = vpop.f32.mrb[0].mxu0
    %v1201 = vadd.f32 0.0, %v1200
    %v1202 = vpop.f32.mrb[0].mxu0
    %v1203 = vadd.f32 0.0, %v1202
    %1204 = vdwg.mxu0
    %1205 = vmatprep.subr.mxu0 0.0
    %1206 = vmatpush1.msra.mxu0 %v399
    %1207 = vmatprep.subr.mxu0 0.0
    %1208 = vmatpush1.msra.mxu0 %v402
    %1209 = vmatprep.subr.mxu0 0.0
    %1210 = vmatpush1.msra.mxu0 %v405
    %1211 = vmatprep.subr.mxu0 0.0
    %1212 = vmatpush1.msra.mxu0 %v408
    %1213 = vmatprep.subr.mxu0 0.0
    %1214 = vmatpush1.msra.mxu0 %v411
    %1215 = vmatprep.subr.mxu0 0.0
    %1216 = vmatpush1.msra.mxu0 %v414
    %1217 = vmatprep.subr.mxu0 0.0
    %1218 = vmatpush1.msra.mxu0 %v417
    %1219 = vmatprep.subr.mxu0 0.0
    %1220 = vmatpush1.msra.mxu0 %v420
    %1221 = vmatprep.subr.mxu0 0.0
    %1222 = vmatpush1.msra.mxu0 %v423
    %1223 = vmatprep.subr.mxu0 0.0
    %1224 = vmatpush1.msra.mxu0 %v426
    %1225 = vmatprep.subr.mxu0 0.0
    %1226 = vmatpush1.msra.mxu0 %v429
    %1227 = vmatprep.subr.mxu0 0.0
    %1228 = vmatpush1.msra.mxu0 %v432
    %1229 = vmatprep.subr.mxu0 0.0
    %1230 = vmatpush1.msra.mxu0 %v435
    %1231 = vmatprep.subr.mxu0 0.0
    %1232 = vmatpush1.msra.mxu0 %v438
    %1233 = vmatprep.subr.mxu0 0.0
    %1234 = vmatpush1.msra.mxu0 %v441
    %1235 = vmatprep.subr.mxu0 0.0
    %1236 = vmatpush1.msra.mxu0 %v444
    %1237 = vmatprep.subr.mxu0 0.0
    %1238 = vmatpush1.msra.mxu0 0.0
    %1239 = vmatprep.subr.mxu0 0.0
    %1240 = vmatpush1.msra.mxu0 0.0
    %1241 = vmatprep.subr.mxu0 0.0
    %1242 = vmatpush1.msra.mxu0 0.0
    %1243 = vmatprep.subr.mxu0 0.0
    %1244 = vmatpush1.msra.mxu0 0.0
    %1245 = vmatprep.subr.mxu0 0.0
    %1246 = vmatpush1.msra.mxu0 0.0
    %1247 = vmatprep.subr.mxu0 0.0
    %1248 = vmatpush1.msra.mxu0 0.0
    %1249 = vmatprep.subr.mxu0 0.0
    %1250 = vmatpush1.msra.mxu0 0.0
    %1251 = vmatprep.subr.mxu0 0.0
    %1252 = vmatpush1.msra.mxu0 0.0
    %1253 = vmatprep.subr.mxu0 0.0
    %1254 = vmatpush1.msra.mxu0 0.0
    %1255 = vmatprep.subr.mxu0 0.0
    %1256 = vmatpush1.msra.mxu0 0.0
    %1257 = vmatprep.subr.mxu0 0.0
    %1258 = vmatpush1.msra.mxu0 0.0
    %1259 = vmatprep.subr.mxu0 0.0
    %1260 = vmatpush1.msra.mxu0 0.0
    %1261 = vmatprep.subr.mxu0 0.0
    %1262 = vmatpush1.msra.mxu0 0.0
    %1263 = vmatprep.subr.mxu0 0.0
    %1264 = vmatpush1.msra.mxu0 0.0
    %1265 = vmatprep.subr.mxu0 0.0
    %1266 = vmatpush1.msra.mxu0 0.0
    %1267 = vmatprep.subr.mxu0 0.0
    %1268 = vmatpush1.msra.mxu0 0.0
    %1269 = vmatprep.mubr.f32.mxu0 0.0
    %1270 = vmatmul.mubr.f32.gmra.mrb[0].mxu0 %v1127
    %v1271 = vpop.f32.mrb[0].mxu0
    %v1272 = vadd.f32 0.0, %v1271
    %v1273 = vpop.f32.mrb[0].mxu0
    %1274 = vdwg.mxu0
    %v1275 = vadd.f32 %v1131, %v1201
    %v1276 = vxor.u32 %v1275, 2147483648
    %v1277 = vmul.f32 %v1276, 1.442695
    %v1278 = vpow.pop %v1277
    %v1279 = vadd.f32 %v1278, 1.0
    %v1280 = vrcp.pop %v1279
    %v1281 = vmul.f32 1.0, %v1280
    %v1282 = vadd.f32 %v1132, %v1203
    %v1283 = vxor.u32 %v1282, 2147483648
    %v1284 = vmul.f32 %v1283, 1.442695
    %v1285 = vpow.pop %v1284
    %v1286 = vadd.f32 %v1285, 1.0
    %v1287 = vrcp.pop %v1286
    %v1288 = vmul.f32 1.0, %v1287
    %v1289 = vadd.f32 %v1272, %v450
    %v1290 = vmul.f32 %v1281, %v1289
    %v1291 = vadd.f32 %v1133, %v1290
    %v1292 = vtanh.pop %v1291
    %v1293 = vsub.f32 1.0, %v1288
    %v1294 = vmul.f32 %v1293, %v1292
    %v1295 = vmul.f32 %v1288, %v1127
    %v1296 = vadd.f32 %v1294, %v1295
    %s1297 = smul.u32 5, 3
    %s1298 = smul.addr %s1297, 8
    %s1299 = scalar_lea.vmem [#allocation2], %s1298
    %v1300 = vld [vmem:[%s1299] sm:$0xff]
    %v1301 = vld [vmem:[%s1299 + $0x8] sm:$0xff]
    %v1302 = vld [vmem:[%s1299 + $0x10] sm:$0xff]
    %1303 = vmatprep.subr.mxu0 %v398
    %1304 = vmatpush1.msra.mxu0 %v397
    %1305 = vmatprep.subr.mxu0 %v401
    %1306 = vmatpush1.msra.mxu0 %v400
    %1307 = vmatprep.subr.mxu0 %v404
    %1308 = vmatpush1.msra.mxu0 %v403
    %1309 = vmatprep.subr.mxu0 %v407
    %1310 = vmatpush1.msra.mxu0 %v406
    %1311 = vmatprep.subr.mxu0 %v410
    %1312 = vmatpush1.msra.mxu0 %v409
    %1313 = vmatprep.subr.mxu0 %v413
    %1314 = vmatpush1.msra.mxu0 %v412
    %1315 = vmatprep.subr.mxu0 %v416
    %1316 = vmatpush1.msra.mxu0 %v415
    %1317 = vmatprep.subr.mxu0 %v419
    %1318 = vmatpush1.msra.mxu0 %v418
    %1319 = vmatprep.subr.mxu0 %v422
    %1320 = vmatpush1.msra.mxu0 %v421
    %1321 = vmatprep.subr.mxu0 %v425
    %1322 = vmatpush1.msra.mxu0 %v424
    %1323 = vmatprep.subr.mxu0 %v428
    %1324 = vmatpush1.msra.mxu0 %v427
    %1325 = vmatprep.subr.mxu0 %v431
    %1326 = vmatpush1.msra.mxu0 %v430
    %1327 = vmatprep.subr.mxu0 %v434
    %1328 = vmatpush1.msra.mxu0 %v433
    %1329 = vmatprep.subr.mxu0 %v437
    %1330 = vmatpush1.msra.mxu0 %v436
    %1331 = vmatprep.subr.mxu0 %v440
    %1332 = vmatpush1.msra.mxu0 %v439
    %1333 = vmatprep.subr.mxu0 %v443
    %1334 = vmatpush1.msra.mxu0 %v442
    %1335 = vmatprep.subr.mxu0 0.0
    %1336 = vmatpush1.msra.mxu0 0.0
    %1337 = vmatprep.subr.mxu0 0.0
    %1338 = vmatpush1.msra.mxu0 0.0
    %1339 = vmatprep.subr.mxu0 0.0
    %1340 = vmatpush1.msra.mxu0 0.0
    %1341 = vmatprep.subr.mxu0 0.0
    %1342 = vmatpush1.msra.mxu0 0.0
    %1343 = vmatprep.subr.mxu0 0.0
    %1344 = vmatpush1.msra.mxu0 0.0
    %1345 = vmatprep.subr.mxu0 0.0
    %1346 = vmatpush1.msra.mxu0 0.0
    %1347 = vmatprep.subr.mxu0 0.0
    %1348 = vmatpush1.msra.mxu0 0.0
    %1349 = vmatprep.subr.mxu0 0.0
    %1350 = vmatpush1.msra.mxu0 0.0
    %1351 = vmatprep.subr.mxu0 0.0
    %1352 = vmatpush1.msra.mxu0 0.0
    %1353 = vmatprep.subr.mxu0 0.0
    %1354 = vmatpush1.msra.mxu0 0.0
    %1355 = vmatprep.subr.mxu0 0.0
    %1356 = vmatpush1.msra.mxu0 0.0
    %1357 = vmatprep.subr.mxu0 0.0
    %1358 = vmatpush1.msra.mxu0 0.0
    %1359 = vmatprep.subr.mxu0 0.0
    %1360 = vmatpush1.msra.mxu0 0.0
    %1361 = vmatprep.subr.mxu0 0.0
    %1362 = vmatpush1.msra.mxu0 0.0
    %1363 = vmatprep.subr.mxu0 0.0
    %1364 = vmatpush1.msra.mxu0 0.0
    %1365 = vmatprep.subr.mxu0 0.0
    %1366 = vmatpush1.msra.mxu0 0.0
    %1367 = vmatprep.mubr.f32.mxu0 0.0
    %1368 = vmatmul.mubr.f32.gmra.mrb[0].mxu0 %v1296
    %v1369 = vpop.f32.mrb[0].mxu0
    %v1370 = vadd.f32 0.0, %v1369
    %v1371 = vpop.f32.mrb[0].mxu0
    %v1372 = vadd.f32 0.0, %v1371
    %1373 = vdwg.mxu0
    %1374 = vmatprep.subr.mxu0 0.0
    %1375 = vmatpush1.msra.mxu0 %v399
    %1376 = vmatprep.subr.mxu0 0.0
    %1377 = vmatpush1.msra.mxu0 %v402
    %1378 = vmatprep.subr.mxu0 0.0
    %1379 = vmatpush1.msra.mxu0 %v405
    %1380 = vmatprep.subr.mxu0 0.0
    %1381 = vmatpush1.msra.mxu0 %v408
    %1382 = vmatprep.subr.mxu0 0.0
    %1383 = vmatpush1.msra.mxu0 %v411
    %1384 = vmatprep.subr.mxu0 0.0
    %1385 = vmatpush1.msra.mxu0 %v414
    %1386 = vmatprep.subr.mxu0 0.0
    %1387 = vmatpush1.msra.mxu0 %v417
    %1388 = vmatprep.subr.mxu0 0.0
    %1389 = vmatpush1.msra.mxu0 %v420
    %1390 = vmatprep.subr.mxu0 0.0
    %1391 = vmatpush1.msra.mxu0 %v423
    %1392 = vmatprep.subr.mxu0 0.0
    %1393 = vmatpush1.msra.mxu0 %v426
    %1394 = vmatprep.subr.mxu0 0.0
    %1395 = vmatpush1.msra.mxu0 %v429
    %1396 = vmatprep.subr.mxu0 0.0
    %1397 = vmatpush1.msra.mxu0 %v432
    %1398 = vmatprep.subr.mxu0 0.0
    %1399 = vmatpush1.msra.mxu0 %v435
    %1400 = vmatprep.subr.mxu0 0.0
    %1401 = vmatpush1.msra.mxu0 %v438
    %1402 = vmatprep.subr.mxu0 0.0
    %1403 = vmatpush1.msra.mxu0 %v441
    %1404 = vmatprep.subr.mxu0 0.0
    %1405 = vmatpush1.msra.mxu0 %v444
    %1406 = vmatprep.subr.mxu0 0.0
    %1407 = vmatpush1.msra.mxu0 0.0
    %1408 = vmatprep.subr.mxu0 0.0
    %1409 = vmatpush1.msra.mxu0 0.0
    %1410 = vmatprep.subr.mxu0 0.0
    %1411 = vmatpush1.msra.mxu0 0.0
    %1412 = vmatprep.subr.mxu0 0.0
    %1413 = vmatpush1.msra.mxu0 0.0
    %1414 = vmatprep.subr.mxu0 0.0
    %1415 = vmatpush1.msra.mxu0 0.0
    %1416 = vmatprep.subr.mxu0 0.0
    %1417 = vmatpush1.msra.mxu0 0.0
    %1418 = vmatprep.subr.mxu0 0.0
    %1419 = vmatpush1.msra.mxu0 0.0
    %1420 = vmatprep.subr.mxu0 0.0
    %1421 = vmatpush1.msra.mxu0 0.0
    %1422 = vmatprep.subr.mxu0 0.0
    %1423 = vmatpush1.msra.mxu0 0.0
    %1424 = vmatprep.subr.mxu0 0.0
    %1425 = vmatpush1.msra.mxu0 0.0
    %1426 = vmatprep.subr.mxu0 0.0
    %1427 = vmatpush1.msra.mxu0 0.0
    %1428 = vmatprep.subr.mxu0 0.0
    %1429 = vmatpush1.msra.mxu0 0.0
    %1430 = vmatprep.subr.mxu0 0.0
    %1431 = vmatpush1.msra.mxu0 0.0
    %1432 = vmatprep.subr.mxu0 0.0
    %1433 = vmatpush1.msra.mxu0 0.0
    %1434 = vmatprep.subr.mxu0 0.0
    %1435 = vmatpush1.msra.mxu0 0.0
    %1436 = vmatprep.subr.mxu0 0.0
    %1437 = vmatpush1.msra.mxu0 0.0
    %1438 = vmatprep.mubr.f32.mxu0 0.0
    %1439 = vmatmul.mubr.f32.gmra.mrb[0].mxu0 %v1296
    %v1440 = vpop.f32.mrb[0].mxu0
    %v1441 = vadd.f32 0.0, %v1440
    %v1442 = vpop.f32.mrb[0].mxu0
    %1443 = vdwg.mxu0
    %v1444 = vadd.f32 %v1300, %v1370
    %v1445 = vxor.u32 %v1444, 2147483648
    %v1446 = vmul.f32 %v1445, 1.442695
    %v1447 = vpow.pop %v1446
    %v1448 = vadd.f32 %v1447, 1.0
    %v1449 = vrcp.pop %v1448
    %v1450 = vmul.f32 1.0, %v1449
    %v1451 = vadd.f32 %v1301, %v1372
    %v1452 = vxor.u32 %v1451, 2147483648
    %v1453 = vmul.f32 %v1452, 1.442695
    %v1454 = vpow.pop %v1453
    %v1455 = vadd.f32 %v1454, 1.0
    %v1456 = vrcp.pop %v1455
    %v1457 = vmul.f32 1.0, %v1456
    %v1458 = vadd.f32 %v1441, %v450
    %v1459 = vmul.f32 %v1450, %v1458
    %v1460 = vadd.f32 %v1302, %v1459
    %v1461 = vtanh.pop %v1460
    %v1462 = vsub.f32 1.0, %v1457
    %v1463 = vmul.f32 %v1462, %v1461
    %v1464 = vmul.f32 %v1457, %v1296
    %v1465 = vadd.f32 %v1463, %v1464
    %s1466 = smul.u32 6, 3
    %s1467 = smul.addr %s1466, 8
    %s1468 = scalar_lea.vmem [#allocation2], %s1467
    %v1469 = vld [vmem:[%s1468] sm:$0xff]
    %v1470 = vld [vmem:[%s1468 + $0x8] sm:$0xff]
    %v1471 = vld [vmem:[%s1468 + $0x10] sm:$0xff]
    %1472 = vmatprep.subr.mxu0 %v398
    %1473 = vmatpush1.msra.mxu0 %v397
    %1474 = vmatprep.subr.mxu0 %v401
    %1475 = vmatpush1.msra.mxu0 %v400
    %1476 = vmatprep.subr.mxu0 %v404
    %1477 = vmatpush1.msra.mxu0 %v403
    %1478 = vmatprep.subr.mxu0 %v407
    %1479 = vmatpush1.msra.mxu0 %v406
    %1480 = vmatprep.subr.mxu0 %v410
    %1481 = vmatpush1.msra.mxu0 %v409
    %1482 = vmatprep.subr.mxu0 %v413
    %1483 = vmatpush1.msra.mxu0 %v412
    %1484 = vmatprep.subr.mxu0 %v416
    %1485 = vmatpush1.msra.mxu0 %v415
    %1486 = vmatprep.subr.mxu0 %v419
    %1487 = vmatpush1.msra.mxu0 %v418
    %1488 = vmatprep.subr.mxu0 %v422
    %1489 = vmatpush1.msra.mxu0 %v421
    %1490 = vmatprep.subr.mxu0 %v425
    %1491 = vmatpush1.msra.mxu0 %v424
    %1492 = vmatprep.subr.mxu0 %v428
    %1493 = vmatpush1.msra.mxu0 %v427
    %1494 = vmatprep.subr.mxu0 %v431
    %1495 = vmatpush1.msra.mxu0 %v430
    %1496 = vmatprep.subr.mxu0 %v434
    %1497 = vmatpush1.msra.mxu0 %v433
    %1498 = vmatprep.subr.mxu0 %v437
    %1499 = vmatpush1.msra.mxu0 %v436
    %1500 = vmatprep.subr.mxu0 %v440
    %1501 = vmatpush1.msra.mxu0 %v439
    %1502 = vmatprep.subr.mxu0 %v443
    %1503 = vmatpush1.msra.mxu0 %v442
    %1504 = vmatprep.subr.mxu0 0.0
    %1505 = vmatpush1.msra.mxu0 0.0
    %1506 = vmatprep.subr.mxu0 0.0
    %1507 = vmatpush1.msra.mxu0 0.0
    %1508 = vmatprep.subr.mxu0 0.0
    %1509 = vmatpush1.msra.mxu0 0.0
    %1510 = vmatprep.subr.mxu0 0.0
    %1511 = vmatpush1.msra.mxu0 0.0
    %1512 = vmatprep.subr.mxu0 0.0
    %1513 = vmatpush1.msra.mxu0 0.0
    %1514 = vmatprep.subr.mxu0 0.0
    %1515 = vmatpush1.msra.mxu0 0.0
    %1516 = vmatprep.subr.mxu0 0.0
    %1517 = vmatpush1.msra.mxu0 0.0
    %1518 = vmatprep.subr.mxu0 0.0
    %1519 = vmatpush1.msra.mxu0 0.0
    %1520 = vmatprep.subr.mxu0 0.0
    %1521 = vmatpush1.msra.mxu0 0.0
    %1522 = vmatprep.subr.mxu0 0.0
    %1523 = vmatpush1.msra.mxu0 0.0
    %1524 = vmatprep.subr.mxu0 0.0
    %1525 = vmatpush1.msra.mxu0 0.0
    %1526 = vmatprep.subr.mxu0 0.0
    %1527 = vmatpush1.msra.mxu0 0.0
    %1528 = vmatprep.subr.mxu0 0.0
    %1529 = vmatpush1.msra.mxu0 0.0
    %1530 = vmatprep.subr.mxu0 0.0
    %1531 = vmatpush1.msra.mxu0 0.0
    %1532 = vmatprep.subr.mxu0 0.0
    %1533 = vmatpush1.msra.mxu0 0.0
    %1534 = vmatprep.subr.mxu0 0.0
    %1535 = vmatpush1.msra.mxu0 0.0
    %1536 = vmatprep.mubr.f32.mxu0 0.0
    %1537 = vmatmul.mubr.f32.gmra.mrb[0].mxu0 %v1465
    %v1538 = vpop.f32.mrb[0].mxu0
    %v1539 = vadd.f32 0.0, %v1538
    %v1540 = vpop.f32.mrb[0].mxu0
    %v1541 = vadd.f32 0.0, %v1540
    %1542 = vdwg.mxu0
    %1543 = vmatprep.subr.mxu0 0.0
    %1544 = vmatpush1.msra.mxu0 %v399
    %1545 = vmatprep.subr.mxu0 0.0
    %1546 = vmatpush1.msra.mxu0 %v402
    %1547 = vmatprep.subr.mxu0 0.0
    %1548 = vmatpush1.msra.mxu0 %v405
    %1549 = vmatprep.subr.mxu0 0.0
    %1550 = vmatpush1.msra.mxu0 %v408
    %1551 = vmatprep.subr.mxu0 0.0
    %1552 = vmatpush1.msra.mxu0 %v411
    %1553 = vmatprep.subr.mxu0 0.0
    %1554 = vmatpush1.msra.mxu0 %v414
    %1555 = vmatprep.subr.mxu0 0.0
    %1556 = vmatpush1.msra.mxu0 %v417
    %1557 = vmatprep.subr.mxu0 0.0
    %1558 = vmatpush1.msra.mxu0 %v420
    %1559 = vmatprep.subr.mxu0 0.0
    %1560 = vmatpush1.msra.mxu0 %v423
    %1561 = vmatprep.subr.mxu0 0.0
    %1562 = vmatpush1.msra.mxu0 %v426
    %1563 = vmatprep.subr.mxu0 0.0
    %1564 = vmatpush1.msra.mxu0 %v429
    %1565 = vmatprep.subr.mxu0 0.0
    %1566 = vmatpush1.msra.mxu0 %v432
    %1567 = vmatprep.subr.mxu0 0.0
    %1568 = vmatpush1.msra.mxu0 %v435
    %1569 = vmatprep.subr.mxu0 0.0
    %1570 = vmatpush1.msra.mxu0 %v438
    %1571 = vmatprep.subr.mxu0 0.0
    %1572 = vmatpush1.msra.mxu0 %v441
    %1573 = vmatprep.subr.mxu0 0.0
    %1574 = vmatpush1.msra.mxu0 %v444
    %1575 = vmatprep.subr.mxu0 0.0
    %1576 = vmatpush1.msra.mxu0 0.0
    %1577 = vmatprep.subr.mxu0 0.0
    %1578 = vmatpush1.msra.mxu0 0.0
    %1579 = vmatprep.subr.mxu0 0.0
    %1580 = vmatpush1.msra.mxu0 0.0
    %1581 = vmatprep.subr.mxu0 0.0
    %1582 = vmatpush1.msra.mxu0 0.0
    %1583 = vmatprep.subr.mxu0 0.0
    %1584 = vmatpush1.msra.mxu0 0.0
    %1585 = vmatprep.subr.mxu0 0.0
    %1586 = vmatpush1.msra.mxu0 0.0
    %1587 = vmatprep.subr.mxu0 0.0
    %1588 = vmatpush1.msra.mxu0 0.0
    %1589 = vmatprep.subr.mxu0 0.0
    %1590 = vmatpush1.msra.mxu0 0.0
    %1591 = vmatprep.subr.mxu0 0.0
    %1592 = vmatpush1.msra.mxu0 0.0
    %1593 = vmatprep.subr.mxu0 0.0
    %1594 = vmatpush1.msra.mxu0 0.0
    %1595 = vmatprep.subr.mxu0 0.0
    %1596 = vmatpush1.msra.mxu0 0.0
    %1597 = vmatprep.subr.mxu0 0.0
    %1598 = vmatpush1.msra.mxu0 0.0
    %1599 = vmatprep.subr.mxu0 0.0
    %1600 = vmatpush1.msra.mxu0 0.0
    %1601 = vmatprep.subr.mxu0 0.0
    %1602 = vmatpush1.msra.mxu0 0.0
    %1603 = vmatprep.subr.mxu0 0.0
    %1604 = vmatpush1.msra.mxu0 0.0
    %1605 = vmatprep.subr.mxu0 0.0
    %1606 = vmatpush1.msra.mxu0 0.0
    %1607 = vmatprep.mubr.f32.mxu0 0.0
    %1608 = vmatmul.mubr.f32.gmra.mrb[0].mxu0 %v1465
    %v1609 = vpop.f32.mrb[0].mxu0
    %v1610 = vadd.f32 0.0, %v1609
    %v1611 = vpop.f32.mrb[0].mxu0
    %1612 = vdwg.mxu0
    %v1613 = vadd.f32 %v1469, %v1539
    %v1614 = vxor.u32 %v1613, 2147483648
    %v1615 = vmul.f32 %v1614, 1.442695
    %v1616 = vpow.pop %v1615
    %v1617 = vadd.f32 %v1616, 1.0
    %v1618 = vrcp.pop %v1617
    %v1619 = vmul.f32 1.0, %v1618
    %v1620 = vadd.f32 %v1470, %v1541
    %v1621 = vxor.u32 %v1620, 2147483648
    %v1622 = vmul.f32 %v1621, 1.442695
    %v1623 = vpow.pop %v1622
    %v1624 = vadd.f32 %v1623, 1.0
    %v1625 = vrcp.pop %v1624
    %v1626 = vmul.f32 1.0, %v1625
    %v1627 = vadd.f32 %v1610, %v450
    %v1628 = vmul.f32 %v1619, %v1627
    %v1629 = vadd.f32 %v1471, %v1628
    %v1630 = vtanh.pop %v1629
    %v1631 = vsub.f32 1.0, %v1626
    %v1632 = vmul.f32 %v1631, %v1630
    %v1633 = vmul.f32 %v1626, %v1465
    %v1634 = vadd.f32 %v1632, %v1633
    %s1635 = smul.u32 7, 3
    %s1636 = smul.addr %s1635, 8
    %s1637 = scalar_lea.vmem [#allocation2], %s1636
    %v1638 = vld [vmem:[%s1637] sm:$0xff]
    %v1639 = vld [vmem:[%s1637 + $0x8] sm:$0xff]
    %v1640 = vld [vmem:[%s1637 + $0x10] sm:$0xff]
    %1641 = vmatprep.subr.mxu0 %v398
    %1642 = vmatpush1.msra.mxu0 %v397
    %1643 = vmatprep.subr.mxu0 %v401
    %1644 = vmatpush1.msra.mxu0 %v400
    %1645 = vmatprep.subr.mxu0 %v404
    %1646 = vmatpush1.msra.mxu0 %v403
    %1647 = vmatprep.subr.mxu0 %v407
    %1648 = vmatpush1.msra.mxu0 %v406
    %1649 = vmatprep.subr.mxu0 %v410
    %1650 = vmatpush1.msra.mxu0 %v409
    %1651 = vmatprep.subr.mxu0 %v413
    %1652 = vmatpush1.msra.mxu0 %v412
    %1653 = vmatprep.subr.mxu0 %v416
    %1654 = vmatpush1.msra.mxu0 %v415
    %1655 = vmatprep.subr.mxu0 %v419
    %1656 = vmatpush1.msra.mxu0 %v418
    %1657 = vmatprep.subr.mxu0 %v422
    %1658 = vmatpush1.msra.mxu0 %v421
    %1659 = vmatprep.subr.mxu0 %v425
    %1660 = vmatpush1.msra.mxu0 %v424
    %1661 = vmatprep.subr.mxu0 %v428
    %1662 = vmatpush1.msra.mxu0 %v427
    %1663 = vmatprep.subr.mxu0 %v431
    %1664 = vmatpush1.msra.mxu0 %v430
    %1665 = vmatprep.subr.mxu0 %v434
    %1666 = vmatpush1.msra.mxu0 %v433
    %1667 = vmatprep.subr.mxu0 %v437
    %1668 = vmatpush1.msra.mxu0 %v436
    %1669 = vmatprep.subr.mxu0 %v440
    %1670 = vmatpush1.msra.mxu0 %v439
    %1671 = vmatprep.subr.mxu0 %v443
    %1672 = vmatpush1.msra.mxu0 %v442
    %1673 = vmatprep.subr.mxu0 0.0
    %1674 = vmatpush1.msra.mxu0 0.0
    %1675 = vmatprep.subr.mxu0 0.0
    %1676 = vmatpush1.msra.mxu0 0.0
    %1677 = vmatprep.subr.mxu0 0.0
    %1678 = vmatpush1.msra.mxu0 0.0
    %1679 = vmatprep.subr.mxu0 0.0
    %1680 = vmatpush1.msra.mxu0 0.0
    %1681 = vmatprep.subr.mxu0 0.0
    %1682 = vmatpush1.msra.mxu0 0.0
    %1683 = vmatprep.subr.mxu0 0.0
    %1684 = vmatpush1.msra.mxu0 0.0
    %1685 = vmatprep.subr.mxu0 0.0
    %1686 = vmatpush1.msra.mxu0 0.0
    %1687 = vmatprep.subr.mxu0 0.0
    %1688 = vmatpush1.msra.mxu0 0.0
    %1689 = vmatprep.subr.mxu0 0.0
    %1690 = vmatpush1.msra.mxu0 0.0
    %1691 = vmatprep.subr.mxu0 0.0
    %1692 = vmatpush1.msra.mxu0 0.0
    %1693 = vmatprep.subr.mxu0 0.0
    %1694 = vmatpush1.msra.mxu0 0.0
    %1695 = vmatprep.subr.mxu0 0.0
    %1696 = vmatpush1.msra.mxu0 0.0
    %1697 = vmatprep.subr.mxu0 0.0
    %1698 = vmatpush1.msra.mxu0 0.0
    %1699 = vmatprep.subr.mxu0 0.0
    %1700 = vmatpush1.msra.mxu0 0.0
    %1701 = vmatprep.subr.mxu0 0.0
    %1702 = vmatpush1.msra.mxu0 0.0
    %1703 = vmatprep.subr.mxu0 0.0
    %1704 = vmatpush1.msra.mxu0 0.0
    %1705 = vmatprep.mubr.f32.mxu0 0.0
    %1706 = vmatmul.mubr.f32.gmra.mrb[0].mxu0 %v1634
    %v1707 = vpop.f32.mrb[0].mxu0
    %v1708 = vadd.f32 0.0, %v1707
    %v1709 = vpop.f32.mrb[0].mxu0
    %v1710 = vadd.f32 0.0, %v1709
    %1711 = vdwg.mxu0
    %1712 = vmatprep.subr.mxu0 0.0
    %1713 = vmatpush1.msra.mxu0 %v399
    %1714 = vmatprep.subr.mxu0 0.0
    %1715 = vmatpush1.msra.mxu0 %v402
    %1716 = vmatprep.subr.mxu0 0.0
    %1717 = vmatpush1.msra.mxu0 %v405
    %1718 = vmatprep.subr.mxu0 0.0
    %1719 = vmatpush1.msra.mxu0 %v408
    %1720 = vmatprep.subr.mxu0 0.0
    %1721 = vmatpush1.msra.mxu0 %v411
    %1722 = vmatprep.subr.mxu0 0.0
    %1723 = vmatpush1.msra.mxu0 %v414
    %1724 = vmatprep.subr.mxu0 0.0
    %1725 = vmatpush1.msra.mxu0 %v417
    %1726 = vmatprep.subr.mxu0 0.0
    %1727 = vmatpush1.msra.mxu0 %v420
    %1728 = vmatprep.subr.mxu0 0.0
    %1729 = vmatpush1.msra.mxu0 %v423
    %1730 = vmatprep.subr.mxu0 0.0
    %1731 = vmatpush1.msra.mxu0 %v426
    %1732 = vmatprep.subr.mxu0 0.0
    %1733 = vmatpush1.msra.mxu0 %v429
    %1734 = vmatprep.subr.mxu0 0.0
    %1735 = vmatpush1.msra.mxu0 %v432
    %1736 = vmatprep.subr.mxu0 0.0
    %1737 = vmatpush1.msra.mxu0 %v435
    %1738 = vmatprep.subr.mxu0 0.0
    %1739 = vmatpush1.msra.mxu0 %v438
    %1740 = vmatprep.subr.mxu0 0.0
    %1741 = vmatpush1.msra.mxu0 %v441
    %1742 = vmatprep.subr.mxu0 0.0
    %1743 = vmatpush1.msra.mxu0 %v444
    %1744 = vmatprep.subr.mxu0 0.0
    %1745 = vmatpush1.msra.mxu0 0.0
    %1746 = vmatprep.subr.mxu0 0.0
    %1747 = vmatpush1.msra.mxu0 0.0
    %1748 = vmatprep.subr.mxu0 0.0
    %1749 = vmatpush1.msra.mxu0 0.0
    %1750 = vmatprep.subr.mxu0 0.0
    %1751 = vmatpush1.msra.mxu0 0.0
    %1752 = vmatprep.subr.mxu0 0.0
    %1753 = vmatpush1.msra.mxu0 0.0
    %1754 = vmatprep.subr.mxu0 0.0
    %1755 = vmatpush1.msra.mxu0 0.0
    %1756 = vmatprep.subr.mxu0 0.0
    %1757 = vmatpush1.msra.mxu0 0.0
    %1758 = vmatprep.subr.mxu0 0.0
    %1759 = vmatpush1.msra.mxu0 0.0
    %1760 = vmatprep.subr.mxu0 0.0
    %1761 = vmatpush1.msra.mxu0 0.0
    %1762 = vmatprep.subr.mxu0 0.0
    %1763 = vmatpush1.msra.mxu0 0.0
    %1764 = vmatprep.subr.mxu0 0.0
    %1765 = vmatpush1.msra.mxu0 0.0
    %1766 = vmatprep.subr.mxu0 0.0
    %1767 = vmatpush1.msra.mxu0 0.0
    %1768 = vmatprep.subr.mxu0 0.0
    %1769 = vmatpush1.msra.mxu0 0.0
    %1770 = vmatprep.subr.mxu0 0.0
    %1771 = vmatpush1.msra.mxu0 0.0
    %1772 = vmatprep.subr.mxu0 0.0
    %1773 = vmatpush1.msra.mxu0 0.0
    %1774 = vmatprep.subr.mxu0 0.0
    %1775 = vmatpush1.msra.mxu0 0.0
    %1776 = vmatprep.mubr.f32.mxu0 0.0
    %1777 = vmatmul.mubr.f32.gmra.mrb[0].mxu0 %v1634
    %v1778 = vpop.f32.mrb[0].mxu0
    %v1779 = vadd.f32 0.0, %v1778
    %v1780 = vpop.f32.mrb[0].mxu0
    %1781 = vdwg.mxu0
    %v1782 = vadd.f32 %v1638, %v1708
    %v1783 = vxor.u32 %v1782, 2147483648
    %v1784 = vmul.f32 %v1783, 1.442695
    %v1785 = vpow.pop %v1784
    %v1786 = vadd.f32 %v1785, 1.0
    %v1787 = vrcp.pop %v1786
    %v1788 = vmul.f32 1.0, %v1787
    %v1789 = vadd.f32 %v1639, %v1710
    %v1790 = vxor.u32 %v1789, 2147483648
    %v1791 = vmul.f32 %v1790, 1.442695
    %v1792 = vpow.pop %v1791
    %v1793 = vadd.f32 %v1792, 1.0
    %v1794 = vrcp.pop %v1793
    %v1795 = vmul.f32 1.0, %v1794
    %v1796 = vadd.f32 %v1779, %v450
    %v1797 = vmul.f32 %v1788, %v1796
    %v1798 = vadd.f32 %v1640, %v1797
    %v1799 = vtanh.pop %v1798
    %v1800 = vsub.f32 1.0, %v1795
    %v1801 = vmul.f32 %v1800, %v1799
    %v1802 = vmul.f32 %v1795, %v1634
    %v1803 = vadd.f32 %v1801, %v1802
    %v1804 = vld [vmem:[#allocation9] sm:$0xff]
    %v1805 = vld [vmem:[#allocation9 + $0x8] sm:$0xff]
    %v1806 = vld [vmem:[#allocation9 + $0x10] sm:$0xff]
    %v1807 = vld [vmem:[#allocation9 + $0x18] sm:$0xff]
    %v1808 = vld [vmem:[#allocation9 + $0x20] sm:$0xff]
    %v1809 = vld [vmem:[#allocation9 + $0x28] sm:$0xff]
    %v1810 = vld [vmem:[#allocation9 + $0x30] sm:$0xff]
    %v1811 = vld [vmem:[#allocation9 + $0x38] sm:$0xff]
    %v1812 = vld [vmem:[#allocation9 + $0x40] sm:$0xff]
    %v1813 = vld [vmem:[#allocation9 + $0x48] sm:$0xff]
    %v1814 = vld [vmem:[#allocation9 + $0x50] sm:$0xff]
    %v1815 = vld [vmem:[#allocation9 + $0x58] sm:$0xff]
    %v1816 = vld [vmem:[#allocation9 + $0x60] sm:$0xff]
    %v1817 = vld [vmem:[#allocation9 + $0x68] sm:$0xff]
    %v1818 = vld [vmem:[#allocation9 + $0x70] sm:$0xff]
    %v1819 = vld [vmem:[#allocation9 + $0x78] sm:$0xff]
    %v1820 = vld [vmem:[%s6] sm:$0x1]
    %v1822 = vlaneseq
    %v1823 = vshrl.u32 %v1822, 7
    %v1824 = vsub.s32 0, %v1823
    %v1825 = vrot.slane %v1820, %v1824
    %1827 = vmatprep.subr.mxu0 0.0
    %1828 = vmatpush1.msra.mxu0 %v1804
    %1829 = vmatprep.subr.mxu0 0.0
    %1830 = vmatpush1.msra.mxu0 %v1805
    %1831 = vmatprep.subr.mxu0 0.0
    %1832 = vmatpush1.msra.mxu0 %v1806
    %1833 = vmatprep.subr.mxu0 0.0
    %1834 = vmatpush1.msra.mxu0 %v1807
    %1835 = vmatprep.subr.mxu0 0.0
    %1836 = vmatpush1.msra.mxu0 %v1808
    %1837 = vmatprep.subr.mxu0 0.0
    %1838 = vmatpush1.msra.mxu0 %v1809
    %1839 = vmatprep.subr.mxu0 0.0
    %1840 = vmatpush1.msra.mxu0 %v1810
    %1841 = vmatprep.subr.mxu0 0.0
    %1842 = vmatpush1.msra.mxu0 %v1811
    %1843 = vmatprep.subr.mxu0 0.0
    %1844 = vmatpush1.msra.mxu0 %v1812
    %1845 = vmatprep.subr.mxu0 0.0
    %1846 = vmatpush1.msra.mxu0 %v1813
    %1847 = vmatprep.subr.mxu0 0.0
    %1848 = vmatpush1.msra.mxu0 %v1814
    %1849 = vmatprep.subr.mxu0 0.0
    %1850 = vmatpush1.msra.mxu0 %v1815
    %1851 = vmatprep.subr.mxu0 0.0
    %1852 = vmatpush1.msra.mxu0 %v1816
    %1853 = vmatprep.subr.mxu0 0.0
    %1854 = vmatpush1.msra.mxu0 %v1817
    %1855 = vmatprep.subr.mxu0 0.0
    %1856 = vmatpush1.msra.mxu0 %v1818
    %1857 = vmatprep.subr.mxu0 0.0
    %1858 = vmatpush1.msra.mxu0 %v1819
    %1859 = vmatprep.subr.mxu0 0.0
    %1860 = vmatpush1.msra.mxu0 0.0
    %1861 = vmatprep.subr.mxu0 0.0
    %1862 = vmatpush1.msra.mxu0 0.0
    %1863 = vmatprep.subr.mxu0 0.0
    %1864 = vmatpush1.msra.mxu0 0.0
    %1865 = vmatprep.subr.mxu0 0.0
    %1866 = vmatpush1.msra.mxu0 0.0
    %1867 = vmatprep.subr.mxu0 0.0
    %1868 = vmatpush1.msra.mxu0 0.0
    %1869 = vmatprep.subr.mxu0 0.0
    %1870 = vmatpush1.msra.mxu0 0.0
    %1871 = vmatprep.subr.mxu0 0.0
    %1872 = vmatpush1.msra.mxu0 0.0
    %1873 = vmatprep.subr.mxu0 0.0
    %1874 = vmatpush1.msra.mxu0 0.0
    %1875 = vmatprep.subr.mxu0 0.0
    %1876 = vmatpush1.msra.mxu0 0.0
    %1877 = vmatprep.subr.mxu0 0.0
    %1878 = vmatpush1.msra.mxu0 0.0
    %1879 = vmatprep.subr.mxu0 0.0
    %1880 = vmatpush1.msra.mxu0 0.0
    %1881 = vmatprep.subr.mxu0 0.0
    %1882 = vmatpush1.msra.mxu0 0.0
    %1883 = vmatprep.subr.mxu0 0.0
    %1884 = vmatpush1.msra.mxu0 0.0
    %1885 = vmatprep.subr.mxu0 0.0
    %1886 = vmatpush1.msra.mxu0 0.0
    %1887 = vmatprep.subr.mxu0 0.0
    %1888 = vmatpush1.msra.mxu0 0.0
    %1889 = vmatprep.subr.mxu0 0.0
    %1890 = vmatpush1.msra.mxu0 0.0
    %1891 = vmatprep.mubr.f32.mxu0 0.0
    %1892 = vmatmul.mubr.f32.gmra.mrb[0].mxu0 %v1803
    %v1893 = vpop.f32.mrb[0].mxu0
    %v1894 = vadd.f32 %v1825, %v1893
    %v1895 = vpop.f32.mrb[0].mxu0
    %1896 = vdwg.mxu0
    %1897 = vmax.xlane.f32.xlu0 %v1894
    %v1898 = vpop.xlane.xlu0 %1897
    %v1899 = vsub.f32 %v1894, %v1898
    %v1900 = vmul.f32 %v1899, 1.442695
    %v1901 = vpow.pop %v1900
    %1902 = vadd.xlane.f32.xlu0 %v1901
    %v1903 = vpop.xlane.xlu0 %1902
    %v1904 = vlog2.pop %v1903
    %v1905 = vmul.f32 %v1904, 0.6931472
    %v1906 = vsub.f32 %v1899, %v1905
    %1907 = vst [vmem:[#allocation11] sm:$0xff] %v1906
    // Predicated region
    $region46: #{tpu_custom_call.1} parent=1 // pred_check
      _
    $region47: #{tpu_custom_call.1} parent=1 // pred_check_branch
      %1909 = sbr.rel (0) target = $region49
    $region48: #{tpu_custom_call.1} parent=1 // pred_region
      %s1911 = ssub.s32 128, 128
      %1912 = vsyncadd [#allocation5], %s1911
      %s1914 = sshll.u32 [#allocation11], 4
      %s1915 = int_to_ptr.vmem [resolvable:$true] %s1914
      %1917 = dma.vmem_to_hbm [thread:$0]  %s1915, 128, %s7, [#allocation5]
    $region49: #{tpu_custom_call.1} parent=1 // pred_fallthru
      _
    // Predicated region
    $region50: #{tpu_custom_call.1} parent=1 // pred_check
      _
    $region51: #{tpu_custom_call.1} parent=1 // pred_check_branch
      %1919 = sbr.rel (0) target = $region53
    $region52: #{tpu_custom_call.1} parent=1 // pred_region
      %1920 = dma.done [#allocation5], 128
    $region53: #{tpu_custom_call.1} parent=1 // pred_fallthru
      _
    %1921 = vsyncpa [#allocation4], 1
    %1922 = vsyncpa [#allocation7], 1
    %1923 = vsyncpa [#allocation10], 1
    %1924 = vsyncpa [#allocation5], 1

</llo_original>
